<compile_context>
chip_gen: v7x
topology: tpu7x:2x2x1
jax: 0.10.0
libtpu: 0.0.40
codegen_flags: <defaults>
</compile_context>

<pallas_src>
import functools

import numpy as np
import jax
import jax.numpy as jnp
from jax.experimental import pallas as pl
from jax.experimental.pallas import tpu as pltpu  # noqa: F401  (TPU backend)


# ----------------------------------------------------------------------------
# Host-side helper: flattened 2-D DFT matrix  M = kron(F_H, F_W)  (symmetric)
#   fft2(x)  (flattened over H*W)  ==  x_flat @ M
#   ifft2(X)                       ==  X_flat @ conj(M) / (H*W)
# ----------------------------------------------------------------------------
def _dft_kron_matrix(h, w):
    def dft(n):
        k = np.arange(n)
        return np.exp(-2j * np.pi * np.outer(k, k) / n)

    m = np.kron(dft(h), dft(w))  # (H*W, H*W), complex, symmetric
    return (jnp.asarray(m.real, jnp.float32), jnp.asarray(m.imag, jnp.float32))


# ----------------------------------------------------------------------------
# The single fused kernel
#   planes: (B*C, H*W) float32 ; DFT matrix: (H*W, H*W) ; per-layer filters/bias-DC: (L, B*C, H*W)
# ----------------------------------------------------------------------------
def _fused_block_kernel(activation, layers, bn_denom,
                        xr_ref, xi_ref, mfr_ref, mfi_ref,
                        wgr_ref, wgi_ref, wlr_ref, wli_ref,
                        bdr_ref, bdi_ref, p_ref,
                        out_r_ref, out_i_ref):
    hw = xr_ref.shape[1]
    inv_hw = 1.0 / float(hw)
    eps = 1e-5

    mfr = mfr_ref[...]
    mfi = mfi_ref[...]

    def mm(a, b):
        return jnp.dot(a, b, preferred_element_type=jnp.float32)

    def dft2(ar, ai):           # forward 2-D DFT on the flattened spatial axis
        return mm(ar, mfr) - mm(ai, mfi), mm(ar, mfi) + mm(ai, mfr)

    def idft2(ar, ai):          # inverse 2-D DFT: (.) @ conj(M) / (H*W)
        return ((mm(ar, mfr) + mm(ai, mfi)) * inv_hw,
                (mm(ai, mfr) - mm(ar, mfi)) * inv_hw)

    xr = xr_ref[...]
    xi = xi_ref[...]
    xfr, xfi = dft2(xr, xi)

    # residual branch: fourier_conv2d(x, weight), kept in the frequency domain
    wgr = wgr_ref[...]
    wgi = wgi_ref[...]
    rfr = xfr * wgr - xfi * wgi
    rfi = xfr * wgi + xfi * wgr

    # stacked _FourierConv layers, frequency domain; spatial bias folded in as a DC term
    cr, ci = xfr, xfi
    for l in range(layers):
        flr = wlr_ref[l]
        fli = wli_ref[l]
        nr = cr * flr - ci * fli + bdr_ref[l]
        ni = cr * fli + ci * flr + bdi_ref[l]
        cr, ci = nr, ni

    cur_r, cur_i = idft2(cr, ci)
    res_r, res_i = idft2(rfr, rfi)

    # complex activation (applied to real/imag planes independently)
    if activation == "relu":
        cur_r = jnp.maximum(cur_r, 0.0)
        cur_i = jnp.maximum(cur_i, 0.0)
    elif activation == "relu6":
        cur_r = jnp.clip(cur_r, 0.0, 6.0)
        cur_i = jnp.clip(cur_i, 0.0, 6.0)
    elif activation == "sigmoid":
        cur_r = jax.nn.sigmoid(cur_r)
        cur_i = jax.nn.sigmoid(cur_i)
    elif activation == "silu":
        cur_r = cur_r * jax.nn.sigmoid(cur_r)
        cur_i = cur_i * jax.nn.sigmoid(cur_i)
    # activation in ("None", None): identity

    # naive ComplexBatchNorm (training stats, gamma=1, beta=0), per channel, per plane.
    # p_ref is the (B*C, B*C) channel-selector matrix: P[r, r'] = 1 iff rows r, r' share a channel.
    # TODO(synk): running-stats / eval-mode BN not implemented (training-mode batch stats only).
    p_mat = p_ref[...]

    def chan_bn(t):
        mean = jnp.sum(mm(p_mat, t), axis=1, keepdims=True) * (1.0 / bn_denom)
        d = t - mean
        var = jnp.sum(mm(p_mat, d * d), axis=1, keepdims=True) * (1.0 / bn_denom)
        return d * jax.lax.rsqrt(var + eps)

    out_r_ref[...] = chan_bn(cur_r) + res_r
    out_i_ref[...] = chan_bn(cur_i) + res_i


# ----------------------------------------------------------------------------
# Jitted forward wrapper: host-side packing (reshape/tile, bias->DC fold) + one pallas_call
# ----------------------------------------------------------------------------
@functools.partial(jax.jit, static_argnames=("activation",))
def _ufb_forward(x, weight, w_re, w_im, b_re, b_im, mf_r, mf_i, *, activation):
    B, C, H, W = x.shape
    HW = H * W
    BC = B * C
    L = w_re.shape[0]

    xr = x.real.reshape(BC, HW).astype(jnp.float32)
    xi = x.imag.reshape(BC, HW).astype(jnp.float32)

    # `weight` (C,H,W) and per-layer filters (L,C,H,W): tile over batch so every row of the
    # (B*C, HW) planes has its own lane-dense filter row (row r belongs to channel r % C).
    wgr = jnp.tile(weight.real.reshape(C, HW).astype(jnp.float32), (B, 1))
    wgi = jnp.tile(weight.imag.reshape(C, HW).astype(jnp.float32), (B, 1))
    wlr = jnp.tile(w_re.reshape(L, C, HW), (1, B, 1))
    wli = jnp.tile(w_im.reshape(L, C, HW), (1, B, 1))

    # Spatial per-channel bias b_l == frequency-domain DC term b_l*H*W at bin (0,0) (flat index 0).
    dc_r = jnp.zeros((L, C, HW), jnp.float32).at[:, :, 0].set(b_re * float(HW))
    dc_i = jnp.zeros((L, C, HW), jnp.float32).at[:, :, 0].set(b_im * float(HW))
    bdr = jnp.tile(dc_r, (1, B, 1))
    bdi = jnp.tile(dc_i, (1, B, 1))

    # channel-selector matrix for per-channel BN stats in the (B*C, HW) layout
    rows = jnp.arange(BC)
    p_mat = (rows[:, None] % C == rows[None, :] % C).astype(jnp.float32)

    kernel = functools.partial(_fused_block_kernel, activation, int(L), float(B * HW))
    out_sd = jax.ShapeDtypeStruct((BC, HW), jnp.float32)
    o_r, o_i = pl.pallas_call(kernel, out_shape=(out_sd, out_sd))(
        xr, xi, mf_r, mf_i, wgr, wgi, wlr, wli, bdr, bdi, p_mat)

    return (o_r + 1j * o_i).reshape(B, C, H, W)


# ----------------------------------------------------------------------------
# Module wrapper
# ----------------------------------------------------------------------------
class UpsamplingFourierBlock:
    def __init__(self, in_channels, height, width, bias, layers, activation,
                 pool=None, *, key):
        self.C, self.H, self.W = in_channels, height, width
        self.layers = layers
        self.activation = activation
        # TODO(synk): ComplexUpsamplingBilinear2d (pool is not None) not implemented;
        # pool=None path (nn.Identity) is used here.
        self.pool = pool

        k_wr, k_wi, k_br, k_bi = jax.random.split(key, 4)
        scale = 1.0 / (height * width)
        self.w_re = jax.random.normal(k_wr, (layers, in_channels, height, width),
                                      jnp.float32) * scale
        self.w_im = jax.random.normal(k_wi, (layers, in_channels, height, width),
                                      jnp.float32) * scale
        if bias:
            self.b_re = jax.random.normal(k_br, (layers, in_channels), jnp.float32) * 0.01
            self.b_im = jax.random.normal(k_bi, (layers, in_channels), jnp.float32) * 0.01
        else:
            self.b_re = self.b_im = None

        # flattened 2-D DFT matrix (kron(F_H, F_W)); inverse derived in-kernel as conj(M)/(H*W)
        self.mf_r, self.mf_i = _dft_kron_matrix(height, width)

    def __call__(self, x, weight):
        # x: (B, C, H, W) complex64 ; weight: (C, H, W) complex64 (frequency-domain filter)
        if self.b_re is not None:
            b_re, b_im = self.b_re, self.b_im
        else:
            b_re = jnp.zeros((self.layers, self.C), jnp.float32)
            b_im = jnp.zeros((self.layers, self.C), jnp.float32)
        return _ufb_forward(x, weight, self.w_re, self.w_im, b_re, b_im,
                            self.mf_r, self.mf_i, activation=self.activation)


# ----------------------------------------------------------------------------
# Pure-JAX reference of the per-layer module structure (validation only)
# ----------------------------------------------------------------------------
def _reference_forward(block, x, weight):
    res = jnp.fft.ifft2(jnp.fft.fft2(x, axes=(-2, -1)) * weight[None], axes=(-2, -1))
    cur = x
    for l in range(block.layers):
        w_l = block.w_re[l] + 1j * block.w_im[l]
        cur = jnp.fft.ifft2(jnp.fft.fft2(cur, axes=(-2, -1)) * w_l[None], axes=(-2, -1))
        if block.b_re is not None:
            b_l = block.b_re[l] + 1j * block.b_im[l]
            cur = cur + b_l[None, :, None, None]
    if block.activation == "relu":
        cur = jnp.maximum(cur.real, 0.0) + 1j * jnp.maximum(cur.imag, 0.0)

    def bn(t):
        m = jnp.mean(t, axis=(0, 2, 3), keepdims=True)
        v = jnp.mean((t - m) ** 2, axis=(0, 2, 3), keepdims=True)
        return (t - m) * jax.lax.rsqrt(v + 1e-5)

    cur = bn(cur.real) + 1j * bn(cur.imag)
    return cur + res


if __name__ == "__main__":
    key = jax.random.PRNGKey(0)
    k_xr, k_xi, k_wr, k_wi, k_params = jax.random.split(key, 5)

    B, C, H, W = 2, 4, 16, 16
    x = (jax.random.normal(k_xr, (B, C, H, W), jnp.float32)
         + 1j * jax.random.normal(k_xi, (B, C, H, W), jnp.float32))
    weight = ((jax.random.normal(k_wr, (C, H, W), jnp.float32)
               + 1j * jax.random.normal(k_wi, (C, H, W), jnp.float32))
              * (1.0 / (H * W)))

    block = UpsamplingFourierBlock(in_channels=C, height=H, width=W, bias=True,
                                   layers=2, activation="relu", pool=None,
                                   key=k_params)
    out = block(x, weight)
    out = jax.block_until_ready(out)
    assert out.shape == (B, C, H, W) and jnp.iscomplexobj(out)

    # validate the frequency-domain collapse / DC-bias fold against the per-layer reference
    ref = _reference_forward(block, x, weight)
    err = float(jnp.max(jnp.abs(out - ref)))
    assert err < 5e-2, f"max abs error vs reference: {err}"

    print("KERNEL_OK")
</pallas_src>

<mosaic_0001>
module attributes {stable_mosaic.version = 11 : i64} {
  func.func @_fused_block_kernel(%arg0: memref<8x256xf32, #tpu.memory_space<vmem>>, %arg1: memref<8x256xf32, #tpu.memory_space<vmem>>, %arg2: memref<256x256xf32, #tpu.memory_space<vmem>>, %arg3: memref<256x256xf32, #tpu.memory_space<vmem>>, %arg4: memref<8x256xf32, #tpu.memory_space<vmem>>, %arg5: memref<8x256xf32, #tpu.memory_space<vmem>>, %arg6: memref<2x8x256xf32, #tpu.memory_space<vmem>>, %arg7: memref<2x8x256xf32, #tpu.memory_space<vmem>>, %arg8: memref<2x8x256xf32, #tpu.memory_space<vmem>>, %arg9: memref<2x8x256xf32, #tpu.memory_space<vmem>>, %arg10: memref<8x8xf32, #tpu.memory_space<vmem>>, %arg11: memref<8x256xf32, #tpu.memory_space<vmem>>, %arg12: memref<8x256xf32, #tpu.memory_space<vmem>>) attributes {dimension_semantics = [], scalar_prefetch = 0 : i64, scratch_operands = 0 : i64, tpu.core_type = #tpu.core_type<tc>} {
    %c0 = arith.constant 0 : index
    %c0_0 = arith.constant 0 : index
    %0 = vector.load %arg2[%c0, %c0_0] : memref<256x256xf32, #tpu.memory_space<vmem>>, vector<256x256xf32>
    %c0_1 = arith.constant 0 : index
    %c0_2 = arith.constant 0 : index
    %1 = vector.load %arg3[%c0_1, %c0_2] : memref<256x256xf32, #tpu.memory_space<vmem>>, vector<256x256xf32>
    %c0_3 = arith.constant 0 : index
    %c0_4 = arith.constant 0 : index
    %2 = vector.load %arg0[%c0_3, %c0_4] : memref<8x256xf32, #tpu.memory_space<vmem>>, vector<8x256xf32>
    %c0_5 = arith.constant 0 : index
    %c0_6 = arith.constant 0 : index
    %3 = vector.load %arg1[%c0_5, %c0_6] : memref<8x256xf32, #tpu.memory_space<vmem>>, vector<8x256xf32>
    %cst = arith.constant dense<0.000000e+00> : vector<8x256xf32>
    %4 = tpu.matmul %2, %0, %cst {dimension_numbers = #tpu.dot_dimension_numbers<[1], [0], [0], [1], [0, 0, 1, 1], [], []>} : vector<8x256xf32>, vector<256x256xf32>, vector<8x256xf32> -> vector<8x256xf32>
    %cst_7 = arith.constant dense<0.000000e+00> : vector<8x256xf32>
    %5 = tpu.matmul %3, %1, %cst_7 {dimension_numbers = #tpu.dot_dimension_numbers<[1], [0], [0], [1], [0, 0, 1, 1], [], []>} : vector<8x256xf32>, vector<256x256xf32>, vector<8x256xf32> -> vector<8x256xf32>
    %6 = arith.subf %4, %5 : vector<8x256xf32>
    %cst_8 = arith.constant dense<0.000000e+00> : vector<8x256xf32>
    %7 = tpu.matmul %2, %1, %cst_8 {dimension_numbers = #tpu.dot_dimension_numbers<[1], [0], [0], [1], [0, 0, 1, 1], [], []>} : vector<8x256xf32>, vector<256x256xf32>, vector<8x256xf32> -> vector<8x256xf32>
    %cst_9 = arith.constant dense<0.000000e+00> : vector<8x256xf32>
    %8 = tpu.matmul %3, %0, %cst_9 {dimension_numbers = #tpu.dot_dimension_numbers<[1], [0], [0], [1], [0, 0, 1, 1], [], []>} : vector<8x256xf32>, vector<256x256xf32>, vector<8x256xf32> -> vector<8x256xf32>
    %9 = arith.addf %7, %8 : vector<8x256xf32>
    %c0_10 = arith.constant 0 : index
    %c0_11 = arith.constant 0 : index
    %10 = vector.load %arg4[%c0_10, %c0_11] : memref<8x256xf32, #tpu.memory_space<vmem>>, vector<8x256xf32>
    %c0_12 = arith.constant 0 : index
    %c0_13 = arith.constant 0 : index
    %11 = vector.load %arg5[%c0_12, %c0_13] : memref<8x256xf32, #tpu.memory_space<vmem>>, vector<8x256xf32>
    %12 = arith.mulf %6, %10 : vector<8x256xf32>
    %13 = arith.mulf %9, %11 : vector<8x256xf32>
    %14 = arith.subf %12, %13 : vector<8x256xf32>
    %15 = arith.mulf %6, %11 : vector<8x256xf32>
    %16 = arith.mulf %9, %10 : vector<8x256xf32>
    %17 = arith.addf %15, %16 : vector<8x256xf32>
    %c0_14 = arith.constant 0 : index
    %c0_15 = arith.constant 0 : index
    %c0_16 = arith.constant 0 : index
    %18 = vector.load %arg6[%c0_14, %c0_15, %c0_16] : memref<2x8x256xf32, #tpu.memory_space<vmem>>, vector<1x8x256xf32>
    %19 = vector.shape_cast %18 : vector<1x8x256xf32> to vector<8x256xf32>
    %c0_17 = arith.constant 0 : index
    %c0_18 = arith.constant 0 : index
    %c0_19 = arith.constant 0 : index
    %20 = vector.load %arg7[%c0_17, %c0_18, %c0_19] : memref<2x8x256xf32, #tpu.memory_space<vmem>>, vector<1x8x256xf32>
    %21 = vector.shape_cast %20 : vector<1x8x256xf32> to vector<8x256xf32>
    %22 = arith.mulf %6, %19 : vector<8x256xf32>
    %23 = arith.mulf %9, %21 : vector<8x256xf32>
    %24 = arith.subf %22, %23 : vector<8x256xf32>
    %c0_20 = arith.constant 0 : index
    %c0_21 = arith.constant 0 : index
    %c0_22 = arith.constant 0 : index
    %25 = vector.load %arg8[%c0_20, %c0_21, %c0_22] : memref<2x8x256xf32, #tpu.memory_space<vmem>>, vector<1x8x256xf32>
    %26 = vector.shape_cast %25 : vector<1x8x256xf32> to vector<8x256xf32>
    %27 = arith.addf %24, %26 : vector<8x256xf32>
    %28 = arith.mulf %6, %21 : vector<8x256xf32>
    %29 = arith.mulf %9, %19 : vector<8x256xf32>
    %30 = arith.addf %28, %29 : vector<8x256xf32>
    %c0_23 = arith.constant 0 : index
    %c0_24 = arith.constant 0 : index
    %c0_25 = arith.constant 0 : index
    %31 = vector.load %arg9[%c0_23, %c0_24, %c0_25] : memref<2x8x256xf32, #tpu.memory_space<vmem>>, vector<1x8x256xf32>
    %32 = vector.shape_cast %31 : vector<1x8x256xf32> to vector<8x256xf32>
    %33 = arith.addf %30, %32 : vector<8x256xf32>
    %c1 = arith.constant 1 : index
    %c0_26 = arith.constant 0 : index
    %c0_27 = arith.constant 0 : index
    %34 = vector.load %arg6[%c1, %c0_26, %c0_27] : memref<2x8x256xf32, #tpu.memory_space<vmem>>, vector<1x8x256xf32>
    %35 = vector.shape_cast %34 : vector<1x8x256xf32> to vector<8x256xf32>
    %c1_28 = arith.constant 1 : index
    %c0_29 = arith.constant 0 : index
    %c0_30 = arith.constant 0 : index
    %36 = vector.load %arg7[%c1_28, %c0_29, %c0_30] : memref<2x8x256xf32, #tpu.memory_space<vmem>>, vector<1x8x256xf32>
    %37 = vector.shape_cast %36 : vector<1x8x256xf32> to vector<8x256xf32>
    %38 = arith.mulf %27, %35 : vector<8x256xf32>
    %39 = arith.mulf %33, %37 : vector<8x256xf32>
    %40 = arith.subf %38, %39 : vector<8x256xf32>
    %c1_31 = arith.constant 1 : index
    %c0_32 = arith.constant 0 : index
    %c0_33 = arith.constant 0 : index
    %41 = vector.load %arg8[%c1_31, %c0_32, %c0_33] : memref<2x8x256xf32, #tpu.memory_space<vmem>>, vector<1x8x256xf32>
    %42 = vector.shape_cast %41 : vector<1x8x256xf32> to vector<8x256xf32>
    %43 = arith.addf %40, %42 : vector<8x256xf32>
    %44 = arith.mulf %27, %37 : vector<8x256xf32>
    %45 = arith.mulf %33, %35 : vector<8x256xf32>
    %46 = arith.addf %44, %45 : vector<8x256xf32>
    %c1_34 = arith.constant 1 : index
    %c0_35 = arith.constant 0 : index
    %c0_36 = arith.constant 0 : index
    %47 = vector.load %arg9[%c1_34, %c0_35, %c0_36] : memref<2x8x256xf32, #tpu.memory_space<vmem>>, vector<1x8x256xf32>
    %48 = vector.shape_cast %47 : vector<1x8x256xf32> to vector<8x256xf32>
    %49 = arith.addf %46, %48 : vector<8x256xf32>
    %cst_37 = arith.constant dense<0.000000e+00> : vector<8x256xf32>
    %50 = tpu.matmul %43, %0, %cst_37 {dimension_numbers = #tpu.dot_dimension_numbers<[1], [0], [0], [1], [0, 0, 1, 1], [], []>} : vector<8x256xf32>, vector<256x256xf32>, vector<8x256xf32> -> vector<8x256xf32>
    %cst_38 = arith.constant dense<0.000000e+00> : vector<8x256xf32>
    %51 = tpu.matmul %49, %1, %cst_38 {dimension_numbers = #tpu.dot_dimension_numbers<[1], [0], [0], [1], [0, 0, 1, 1], [], []>} : vector<8x256xf32>, vector<256x256xf32>, vector<8x256xf32> -> vector<8x256xf32>
    %52 = arith.addf %50, %51 : vector<8x256xf32>
    %cst_39 = arith.constant 3.906250e-03 : f32
    %53 = vector.broadcast %cst_39 : f32 to vector<8x256xf32>
    %54 = arith.mulf %52, %53 : vector<8x256xf32>
    %cst_40 = arith.constant dense<0.000000e+00> : vector<8x256xf32>
    %55 = tpu.matmul %49, %0, %cst_40 {dimension_numbers = #tpu.dot_dimension_numbers<[1], [0], [0], [1], [0, 0, 1, 1], [], []>} : vector<8x256xf32>, vector<256x256xf32>, vector<8x256xf32> -> vector<8x256xf32>
    %cst_41 = arith.constant dense<0.000000e+00> : vector<8x256xf32>
    %56 = tpu.matmul %43, %1, %cst_41 {dimension_numbers = #tpu.dot_dimension_numbers<[1], [0], [0], [1], [0, 0, 1, 1], [], []>} : vector<8x256xf32>, vector<256x256xf32>, vector<8x256xf32> -> vector<8x256xf32>
    %57 = arith.subf %55, %56 : vector<8x256xf32>
    %cst_42 = arith.constant 3.906250e-03 : f32
    %58 = vector.broadcast %cst_42 : f32 to vector<8x256xf32>
    %59 = arith.mulf %57, %58 : vector<8x256xf32>
    %cst_43 = arith.constant dense<0.000000e+00> : vector<8x256xf32>
    %60 = tpu.matmul %14, %0, %cst_43 {dimension_numbers = #tpu.dot_dimension_numbers<[1], [0], [0], [1], [0, 0, 1, 1], [], []>} : vector<8x256xf32>, vector<256x256xf32>, vector<8x256xf32> -> vector<8x256xf32>
    %cst_44 = arith.constant dense<0.000000e+00> : vector<8x256xf32>
    %61 = tpu.matmul %17, %1, %cst_44 {dimension_numbers = #tpu.dot_dimension_numbers<[1], [0], [0], [1], [0, 0, 1, 1], [], []>} : vector<8x256xf32>, vector<256x256xf32>, vector<8x256xf32> -> vector<8x256xf32>
    %62 = arith.addf %60, %61 : vector<8x256xf32>
    %cst_45 = arith.constant 3.906250e-03 : f32
    %63 = vector.broadcast %cst_45 : f32 to vector<8x256xf32>
    %64 = arith.mulf %62, %63 : vector<8x256xf32>
    %cst_46 = arith.constant dense<0.000000e+00> : vector<8x256xf32>
    %65 = tpu.matmul %17, %0, %cst_46 {dimension_numbers = #tpu.dot_dimension_numbers<[1], [0], [0], [1], [0, 0, 1, 1], [], []>} : vector<8x256xf32>, vector<256x256xf32>, vector<8x256xf32> -> vector<8x256xf32>
    %cst_47 = arith.constant dense<0.000000e+00> : vector<8x256xf32>
    %66 = tpu.matmul %14, %1, %cst_47 {dimension_numbers = #tpu.dot_dimension_numbers<[1], [0], [0], [1], [0, 0, 1, 1], [], []>} : vector<8x256xf32>, vector<256x256xf32>, vector<8x256xf32> -> vector<8x256xf32>
    %67 = arith.subf %65, %66 : vector<8x256xf32>
    %cst_48 = arith.constant 3.906250e-03 : f32
    %68 = vector.broadcast %cst_48 : f32 to vector<8x256xf32>
    %69 = arith.mulf %67, %68 : vector<8x256xf32>
    %cst_49 = arith.constant 0.000000e+00 : f32
    %70 = vector.broadcast %cst_49 : f32 to vector<8x256xf32>
    %71 = arith.maximumf %54, %70 : vector<8x256xf32>
    %cst_50 = arith.constant 0.000000e+00 : f32
    %72 = vector.broadcast %cst_50 : f32 to vector<8x256xf32>
    %73 = arith.maximumf %59, %72 : vector<8x256xf32>
    %c0_51 = arith.constant 0 : index
    %c0_52 = arith.constant 0 : index
    %74 = vector.load %arg10[%c0_51, %c0_52] : memref<8x8xf32, #tpu.memory_space<vmem>>, vector<8x8xf32>
    %cst_53 = arith.constant dense<0.000000e+00> : vector<8x256xf32>
    %75 = tpu.matmul %74, %71, %cst_53 {dimension_numbers = #tpu.dot_dimension_numbers<[1], [0], [0], [1], [0, 0, 1, 1], [], []>} : vector<8x8xf32>, vector<8x256xf32>, vector<8x256xf32> -> vector<8x256xf32>
    %cst_54 = arith.constant dense<0.000000e+00> : vector<8xf32>
    %76 = vector.multi_reduction <add>, %75, %cst_54 [1] : vector<8x256xf32> to vector<8xf32>
    %77 = vector.shape_cast %76 : vector<8xf32> to vector<8x1xf32>
    %cst_55 = arith.constant 0.001953125 : f32
    %78 = vector.broadcast %cst_55 : f32 to vector<8x1xf32>
    %79 = arith.mulf %77, %78 : vector<8x1xf32>
    %80 = vector.broadcast %79 : vector<8x1xf32> to vector<8x256xf32>
    %81 = arith.subf %71, %80 : vector<8x256xf32>
    %82 = arith.mulf %81, %81 : vector<8x256xf32>
    %cst_56 = arith.constant dense<0.000000e+00> : vector<8x256xf32>
    %83 = tpu.matmul %74, %82, %cst_56 {dimension_numbers = #tpu.dot_dimension_numbers<[1], [0], [0], [1], [0, 0, 1, 1], [], []>} : vector<8x8xf32>, vector<8x256xf32>, vector<8x256xf32> -> vector<8x256xf32>
    %cst_57 = arith.constant dense<0.000000e+00> : vector<8xf32>
    %84 = vector.multi_reduction <add>, %83, %cst_57 [1] : vector<8x256xf32> to vector<8xf32>
    %85 = vector.shape_cast %84 : vector<8xf32> to vector<8x1xf32>
    %cst_58 = arith.constant 0.001953125 : f32
    %86 = vector.broadcast %cst_58 : f32 to vector<8x1xf32>
    %87 = arith.mulf %85, %86 : vector<8x1xf32>
    %cst_59 = arith.constant 9.99999974E-6 : f32
    %88 = vector.broadcast %cst_59 : f32 to vector<8x1xf32>
    %89 = arith.addf %87, %88 : vector<8x1xf32>
    %90 = math.rsqrt %89 : vector<8x1xf32>
    %91 = vector.broadcast %90 : vector<8x1xf32> to vector<8x256xf32>
    %92 = arith.mulf %81, %91 : vector<8x256xf32>
    %93 = arith.addf %92, %64 : vector<8x256xf32>
    %c0_60 = arith.constant 0 : index
    %c0_61 = arith.constant 0 : index
    %94 = vector.load %arg11[%c0_60, %c0_61] : memref<8x256xf32, #tpu.memory_space<vmem>>, vector<8x256xf32>
    tpu.vector_store %arg11[%c0_60, %c0_61], %93 {strides = array<i32>} : memref<8x256xf32, #tpu.memory_space<vmem>>, vector<8x256xf32>,
    %cst_62 = arith.constant dense<0.000000e+00> : vector<8x256xf32>
    %95 = tpu.matmul %74, %73, %cst_62 {dimension_numbers = #tpu.dot_dimension_numbers<[1], [0], [0], [1], [0, 0, 1, 1], [], []>} : vector<8x8xf32>, vector<8x256xf32>, vector<8x256xf32> -> vector<8x256xf32>
    %cst_63 = arith.constant dense<0.000000e+00> : vector<8xf32>
    %96 = vector.multi_reduction <add>, %95, %cst_63 [1] : vector<8x256xf32> to vector<8xf32>
    %97 = vector.shape_cast %96 : vector<8xf32> to vector<8x1xf32>
    %cst_64 = arith.constant 0.001953125 : f32
    %98 = vector.broadcast %cst_64 : f32 to vector<8x1xf32>
    %99 = arith.mulf %97, %98 : vector<8x1xf32>
    %100 = vector.broadcast %99 : vector<8x1xf32> to vector<8x256xf32>
    %101 = arith.subf %73, %100 : vector<8x256xf32>
    %102 = arith.mulf %101, %101 : vector<8x256xf32>
    %cst_65 = arith.constant dense<0.000000e+00> : vector<8x256xf32>
    %103 = tpu.matmul %74, %102, %cst_65 {dimension_numbers = #tpu.dot_dimension_numbers<[1], [0], [0], [1], [0, 0, 1, 1], [], []>} : vector<8x8xf32>, vector<8x256xf32>, vector<8x256xf32> -> vector<8x256xf32>
    %cst_66 = arith.constant dense<0.000000e+00> : vector<8xf32>
    %104 = vector.multi_reduction <add>, %103, %cst_66 [1] : vector<8x256xf32> to vector<8xf32>
    %105 = vector.shape_cast %104 : vector<8xf32> to vector<8x1xf32>
    %cst_67 = arith.constant 0.001953125 : f32
    %106 = vector.broadcast %cst_67 : f32 to vector<8x1xf32>
    %107 = arith.mulf %105, %106 : vector<8x1xf32>
    %cst_68 = arith.constant 9.99999974E-6 : f32
    %108 = vector.broadcast %cst_68 : f32 to vector<8x1xf32>
    %109 = arith.addf %107, %108 : vector<8x1xf32>
    %110 = math.rsqrt %109 : vector<8x1xf32>
    %111 = vector.broadcast %110 : vector<8x1xf32> to vector<8x256xf32>
    %112 = arith.mulf %101, %111 : vector<8x256xf32>
    %113 = arith.addf %112, %69 : vector<8x256xf32>
    %c0_69 = arith.constant 0 : index
    %c0_70 = arith.constant 0 : index
    %114 = vector.load %arg12[%c0_69, %c0_70] : memref<8x256xf32, #tpu.memory_space<vmem>>, vector<8x256xf32>
    tpu.vector_store %arg12[%c0_69, %c0_70], %113 {strides = array<i32>} : memref<8x256xf32, #tpu.memory_space<vmem>>, vector<8x256xf32>,
    return
  }
}

</mosaic_0001>

<llo_original>
// kernel: tile.51
$region0: #{tile.51}
  %s0 = inlined_call_operand.vmem [shape: f32[2,2,4,256], index: 0, kind: input, shape index: {}]
  %s1 = inlined_call_operand.vmem [shape: f32[2,8,256], index: 1, kind: output, shape index: {}]
  $region1: #{tile.51} parent=0
    #allocation0 [shape = 'u8[32768]{0}', space=vmem, size = 0x8000, scoped, tag = 'scoped mem for input reshape']
    %s3 = sshllo.u32 0, 4
    %s4 = smul.addr 4, 7
    %s5 = scalar_lea.vmem %s0, %s4
    %v6 = vld [vmem:[%s5] sm:%s3]
    %s7 = scalar_lea.vmem [#allocation0], 56
    %8 = vst [vmem:[%s7] sm:%s3] %v6
    %s9 = smul.addr 4, 6
    %s10 = scalar_lea.vmem %s0, %s9
    %v11 = vld [vmem:[%s10] sm:%s3]
    %s12 = scalar_lea.vmem [#allocation0], 48
    %13 = vst [vmem:[%s12] sm:%s3] %v11
    %s14 = smul.addr 4, 5
    %s15 = scalar_lea.vmem %s0, %s14
    %v16 = vld [vmem:[%s15] sm:%s3]
    %s17 = scalar_lea.vmem [#allocation0], 40
    %18 = vst [vmem:[%s17] sm:%s3] %v16
    %s19 = smul.addr 4, 4
    %s20 = scalar_lea.vmem %s0, %s19
    %v21 = vld [vmem:[%s20] sm:%s3]
    %s22 = scalar_lea.vmem [#allocation0], 32
    %23 = vst [vmem:[%s22] sm:%s3] %v21
    %s24 = smul.addr 4, 3
    %s25 = scalar_lea.vmem %s0, %s24
    %v26 = vld [vmem:[%s25] sm:%s3]
    %s27 = scalar_lea.vmem [#allocation0], 24
    %28 = vst [vmem:[%s27] sm:%s3] %v26
    %s29 = smul.addr 4, 2
    %s30 = scalar_lea.vmem %s0, %s29
    %v31 = vld [vmem:[%s30] sm:%s3]
    %s32 = scalar_lea.vmem [#allocation0], 16
    %33 = vst [vmem:[%s32] sm:%s3] %v31
    %s34 = scalar_lea.vmem %s0, 4
    %v35 = vld [vmem:[%s34] sm:%s3]
    %s36 = scalar_lea.vmem [#allocation0], 8
    %37 = vst [vmem:[%s36] sm:%s3] %v35
    %v38 = vld [vmem:[%s0] sm:%s3]
    %39 = vst [vmem:[#allocation0] sm:%s3] %v38
    %v40 = vld [vmem:[#allocation0] sm:$0xf]
    %41 = vst [vmem:[%s1] sm:$0xf] %v40
    %s42 = scalar_lea.vmem [#allocation0], 8
    %v43 = vld [vmem:[%s42] sm:$0xf]
    %s44 = scalar_lea.vmem %s1, 8
    %45 = vst [vmem:[%s44] sm:$0xf] %v43
    %s46 = scalar_lea.vmem [#allocation0], 16
    %v47 = vld [vmem:[%s46] sm:$0xf]
    %s48 = scalar_lea.vmem %s1, 4
    %49 = vst [vmem:[%s48] sm:$0xf] %v47
    %s50 = scalar_lea.vmem [#allocation0], 24
    %v51 = vld [vmem:[%s50] sm:$0xf]
    %s52 = scalar_lea.vmem %s1, 12
    %53 = vst [vmem:[%s52] sm:$0xf] %v51
    %s54 = scalar_lea.vmem [#allocation0], 32
    %v55 = vld [vmem:[%s54] sm:$0xf]
    %s56 = scalar_lea.vmem %s1, 16
    %57 = vst [vmem:[%s56] sm:$0xf] %v55
    %s58 = scalar_lea.vmem [#allocation0], 40
    %v59 = vld [vmem:[%s58] sm:$0xf]
    %s60 = scalar_lea.vmem %s1, 24
    %61 = vst [vmem:[%s60] sm:$0xf] %v59
    %s62 = scalar_lea.vmem [#allocation0], 48
    %v63 = vld [vmem:[%s62] sm:$0xf]
    %s64 = scalar_lea.vmem %s1, 20
    %65 = vst [vmem:[%s64] sm:$0xf] %v63
    %s66 = scalar_lea.vmem [#allocation0], 56
    %v67 = vld [vmem:[%s66] sm:$0xf]
    %s68 = scalar_lea.vmem %s1, 28
    %69 = vst [vmem:[%s68] sm:$0xf] %v67

// kernel: custom-call.3
$region0: #{custom-call.3}
  %s0 = inlined_call_operand.hbm [shape: c64[4,16,16], index: 0, kind: input, shape index: {}]
  %s1 = inlined_call_operand.vmem [shape: f32[4,16,16], index: 1, kind: output, shape index: {}]
  %s2 = scalar_lea.hbm %s0, 1024
  $region1: #{custom-call.3} parent=0
    #allocation0 [shape = 's32[1]{0}', space=sflag, size = 0x4, scoped, tag = 'scoped memory for custom-call.3']
    %3 = vsyncpa [#allocation0], 0
    %s4 = sshll.u32 %s1, 4
    %s5 = int_to_ptr.vmem [resolvable:$true] %s4
    %7 = dma.hbm_to_vmem [thread:$0]  %s2, 1024, %s5, [#allocation0]
    %8 = dma.done [#allocation0], 1024
    %9 = vsyncpa [#allocation0], 1

// kernel: tile.33
$region0: #{tile.33}
  %s0 = inlined_call_operand.vmem [shape: f32[2,4,256], index: 0, kind: input, shape index: {}]
  %s1 = inlined_call_operand.vmem [shape: f32[8,256], index: 1, kind: output, shape index: {}]
  $region1: #{tile.33} parent=0
    #allocation0 [shape = 'u8[16384]{0}', space=vmem, size = 0x4000, scoped, tag = 'scoped mem for input reshape']
    %s3 = sshllo.u32 0, 4
    %s4 = smul.addr 4, 3
    %s5 = scalar_lea.vmem %s0, %s4
    %v6 = vld [vmem:[%s5] sm:%s3]
    %s7 = scalar_lea.vmem [#allocation0], 24
    %8 = vst [vmem:[%s7] sm:%s3] %v6
    %s9 = smul.addr 4, 2
    %s10 = scalar_lea.vmem %s0, %s9
    %v11 = vld [vmem:[%s10] sm:%s3]
    %s12 = scalar_lea.vmem [#allocation0], 16
    %13 = vst [vmem:[%s12] sm:%s3] %v11
    %s14 = scalar_lea.vmem %s0, 4
    %v15 = vld [vmem:[%s14] sm:%s3]
    %s16 = scalar_lea.vmem [#allocation0], 8
    %17 = vst [vmem:[%s16] sm:%s3] %v15
    %v18 = vld [vmem:[%s0] sm:%s3]
    %19 = vst [vmem:[#allocation0] sm:%s3] %v18
    %v20 = vld [vmem:[#allocation0] sm:$0xf]
    %21 = vst [vmem:[%s1] sm:$0xf] %v20
    %s22 = scalar_lea.vmem [#allocation0], 8
    %v23 = vld [vmem:[%s22] sm:$0xf]
    %s24 = scalar_lea.vmem %s1, 8
    %25 = vst [vmem:[%s24] sm:$0xf] %v23
    %s26 = scalar_lea.vmem [#allocation0], 16
    %v27 = vld [vmem:[%s26] sm:$0xf]
    %s28 = scalar_lea.vmem %s1, 4
    %29 = vst [vmem:[%s28] sm:$0xf] %v27
    %s30 = scalar_lea.vmem [#allocation0], 24
    %v31 = vld [vmem:[%s30] sm:$0xf]
    %s32 = scalar_lea.vmem %s1, 12
    %33 = vst [vmem:[%s32] sm:$0xf] %v31

// kernel: custom-call.2
$region0: #{custom-call.2}
  %s0 = inlined_call_operand.hbm [shape: c64[4,16,16], index: 0, kind: input, shape index: {}]
  %s1 = inlined_call_operand.vmem [shape: f32[4,16,16], index: 1, kind: output, shape index: {}]
  $region1: #{custom-call.2} parent=0
    #allocation0 [shape = 's32[1]{0}', space=sflag, size = 0x4, scoped, tag = 'scoped memory for custom-call.2']
    %2 = vsyncpa [#allocation0], 0
    %s3 = sshll.u32 %s1, 4
    %s4 = int_to_ptr.vmem [resolvable:$true] %s3
    %6 = dma.hbm_to_vmem [thread:$0]  %s0, 1024, %s4, [#allocation0]
    %7 = dma.done [#allocation0], 1024
    %8 = vsyncpa [#allocation0], 1

// kernel: custom-call.1
$region0: #{custom-call.1}
  %s0 = inlined_call_operand.hbm [shape: c64[2,4,16,16], index: 0, kind: input, shape index: {}]
  %s1 = inlined_call_operand.vmem [shape: f32[2,4,16,16], index: 1, kind: output, shape index: {}]
  %s2 = scalar_lea.hbm %s0, 2048
  $region1: #{custom-call.1} parent=0
    #allocation0 [shape = 's32[1]{0}', space=sflag, size = 0x4, scoped, tag = 'scoped memory for custom-call.1']
    %3 = vsyncpa [#allocation0], 0
    %s4 = sshll.u32 %s1, 4
    %s5 = int_to_ptr.vmem [resolvable:$true] %s4
    %7 = dma.hbm_to_vmem [thread:$0]  %s2, 2048, %s5, [#allocation0]
    %8 = dma.done [#allocation0], 2048
    %9 = vsyncpa [#allocation0], 1

// kernel: custom-call
$region0: #{custom-call}
  %s0 = inlined_call_operand.hbm [shape: c64[2,4,16,16], index: 0, kind: input, shape index: {}]
  %s1 = inlined_call_operand.vmem [shape: f32[2,4,16,16], index: 1, kind: output, shape index: {}]
  $region1: #{custom-call} parent=0
    #allocation0 [shape = 's32[1]{0}', space=sflag, size = 0x4, scoped, tag = 'scoped memory for custom-call']
    %2 = vsyncpa [#allocation0], 0
    %s3 = sshll.u32 %s1, 4
    %s4 = int_to_ptr.vmem [resolvable:$true] %s3
    %6 = dma.hbm_to_vmem [thread:$0]  %s0, 2048, %s4, [#allocation0]
    %7 = dma.done [#allocation0], 2048
    %8 = vsyncpa [#allocation0], 1

// kernel: custom-call.4
$region0: #{custom-call.4}
  %s0 = inlined_call_operand.vmem [shape: f32[2,4,16,16], index: 0, kind: input, shape index: {}]
  %s1 = inlined_call_operand.vmem [shape: f32[2,4,16,16], index: 1, kind: input, shape index: {}]
  %s2 = inlined_call_operand.hbm [shape: c64[2,4,16,16], index: 2, kind: output, shape index: {}]
  %s3 = scalar_lea.hbm %s2, 2048
  $region1: #{custom-call.4} parent=0
    #allocation0 [shape = 's32[1]{0}', space=sflag, size = 0x4, scoped, tag = 'scoped memory for custom-call.4']
    %4 = vsyncpa [#allocation0], 0
    %s5 = sshll.u32 %s0, 4
    %s6 = int_to_ptr.vmem [resolvable:$true] %s5
    %8 = dma.vmem_to_hbm [thread:$0]  %s6, 2048, %s2, [#allocation0]
    %9 = dma.done [#allocation0], 2048
    %10 = vsyncpa [#allocation0], 1
  $region2: #{custom-call.4} parent=0
    #allocation1 [shape = 's32[1]{0}', space=sflag, size = 0x4, scoped, tag = 'scoped memory for custom-call.4']
    %11 = vsyncpa [#allocation1], 0
    %s12 = sshll.u32 %s1, 4
    %s13 = int_to_ptr.vmem [resolvable:$true] %s12
    %15 = dma.vmem_to_hbm [thread:$0]  %s13, 2048, %s3, [#allocation1]
    %16 = dma.done [#allocation1], 2048
    %17 = vsyncpa [#allocation1], 1

// kernel: _ufb_forward.1
$region0: #{_ufb_forward.1}
  #allocation0 [shape = 'u32[]', space=smem, size = 0x4, offset = 0x4, fixed_abs, tag = 'smem constant byte address 0x4 - core index']
  #allocation1 [shape = 'u32[144,128]{1,0:T(1,128)}', space=vmem, size = 0x12000, scoped, tag = 'internal scratch']
  %s0 = inlined_call_operand.vmem [shape: f32[8,256], index: 0, kind: input, shape index: {}]
  %s1 = inlined_call_operand.vmem [shape: f32[8,256], index: 1, kind: input, shape index: {}]
  %s2 = inlined_call_operand.vmem [shape: f32[256,256], index: 2, kind: input, shape index: {}]
  %s3 = inlined_call_operand.vmem [shape: f32[256,256], index: 3, kind: input, shape index: {}]
  %s4 = inlined_call_operand.vmem [shape: f32[8,256], index: 4, kind: input, shape index: {}]
  %s5 = inlined_call_operand.vmem [shape: f32[8,256], index: 5, kind: input, shape index: {}]
  %s6 = inlined_call_operand.vmem [shape: f32[2,8,256], index: 6, kind: input, shape index: {}]
  %s7 = inlined_call_operand.vmem [shape: f32[2,8,256], index: 7, kind: input, shape index: {}]
  %s8 = inlined_call_operand.vmem [shape: f32[2,8,256], index: 8, kind: input, shape index: {}]
  %s9 = inlined_call_operand.vmem [shape: f32[2,8,256], index: 9, kind: input, shape index: {}]
  %s10 = inlined_call_operand.vmem [shape: f32[8,8], index: 10, kind: input, shape index: {}]
  %s11 = inlined_call_operand.vmem [shape: f32[8,256], index: 11, kind: output, shape index: {0}]
  %s12 = inlined_call_operand.vmem [shape: f32[8,256], index: 12, kind: output, shape index: {1}]
  %13 = xla_tuple %s11, %s12
  %s14 = sld [smem:[#allocation0]]
  $region62: #{_ufb_forward.1} parent=0
    _
  %s16 = ssub.s32 1, %s14
  %s17 = scalar_select 0, %s16, %s14
  // Predicated region
  $region2: #{_ufb_forward.1} parent=0 // pred_check
    _
  $region3: #{_ufb_forward.1} parent=0 // pred_check_branch
    %19 = sbr.rel (0) target = $region5
  $region4: #{_ufb_forward.1} parent=0 // pred_region
    _
  $region5: #{_ufb_forward.1} parent=0 // pred_fallthru
    _
  // Predicated region
  $region6: #{_ufb_forward.1} parent=0 // pred_check
    _
  $region7: #{_ufb_forward.1} parent=0 // pred_check_branch
    %21 = sbr.rel (0) target = $region9
  $region8: #{_ufb_forward.1} parent=0 // pred_region
    _
  $region9: #{_ufb_forward.1} parent=0 // pred_fallthru
    _
  // Predicated region
  $region10: #{_ufb_forward.1} parent=0 // pred_check
    _
  $region11: #{_ufb_forward.1} parent=0 // pred_check_branch
    %23 = sbr.rel (0) target = $region13
  $region12: #{_ufb_forward.1} parent=0 // pred_region
    _
  $region13: #{_ufb_forward.1} parent=0 // pred_fallthru
    _
  // Predicated region
  $region14: #{_ufb_forward.1} parent=0 // pred_check
    _
  $region15: #{_ufb_forward.1} parent=0 // pred_check_branch
    %25 = sbr.rel (0) target = $region17
  $region16: #{_ufb_forward.1} parent=0 // pred_region
    _
  $region17: #{_ufb_forward.1} parent=0 // pred_fallthru
    _
  // Predicated region
  $region18: #{_ufb_forward.1} parent=0 // pred_check
    _
  $region19: #{_ufb_forward.1} parent=0 // pred_check_branch
    %27 = sbr.rel (0) target = $region21
  $region20: #{_ufb_forward.1} parent=0 // pred_region
    _
  $region21: #{_ufb_forward.1} parent=0 // pred_fallthru
    _
  // Predicated region
  $region22: #{_ufb_forward.1} parent=0 // pred_check
    _
  $region23: #{_ufb_forward.1} parent=0 // pred_check_branch
    %29 = sbr.rel (0) target = $region25
  $region24: #{_ufb_forward.1} parent=0 // pred_region
    _
  $region25: #{_ufb_forward.1} parent=0 // pred_fallthru
    _
  // Predicated region
  $region26: #{_ufb_forward.1} parent=0 // pred_check
    _
  $region27: #{_ufb_forward.1} parent=0 // pred_check_branch
    %31 = sbr.rel (0) target = $region29
  $region28: #{_ufb_forward.1} parent=0 // pred_region
    _
  $region29: #{_ufb_forward.1} parent=0 // pred_fallthru
    _
  // Predicated region
  $region30: #{_ufb_forward.1} parent=0 // pred_check
    _
  $region31: #{_ufb_forward.1} parent=0 // pred_check_branch
    %33 = sbr.rel (0) target = $region33
  $region32: #{_ufb_forward.1} parent=0 // pred_region
    _
  $region33: #{_ufb_forward.1} parent=0 // pred_fallthru
    _
  // Predicated region
  $region34: #{_ufb_forward.1} parent=0 // pred_check
    _
  $region35: #{_ufb_forward.1} parent=0 // pred_check_branch
    %35 = sbr.rel (0) target = $region37
  $region36: #{_ufb_forward.1} parent=0 // pred_region
    _
  $region37: #{_ufb_forward.1} parent=0 // pred_fallthru
    _
  // Predicated region
  $region38: #{_ufb_forward.1} parent=0 // pred_check
    _
  $region39: #{_ufb_forward.1} parent=0 // pred_check_branch
    %37 = sbr.rel (0) target = $region41
  $region40: #{_ufb_forward.1} parent=0 // pred_region
    _
  $region41: #{_ufb_forward.1} parent=0 // pred_fallthru
    _
  // Predicated region
  $region42: #{_ufb_forward.1} parent=0 // pred_check
    _
  $region43: #{_ufb_forward.1} parent=0 // pred_check_branch
    %39 = sbr.rel (0) target = $region45
  $region44: #{_ufb_forward.1} parent=0 // pred_region
    _
  $region45: #{_ufb_forward.1} parent=0 // pred_fallthru
    _
  %v40 = vld [vmem:[%s2] sm:$0xff]
  %v41 = vld [vmem:[%s2 + $0x8] sm:$0xff]
  %v42 = vld [vmem:[%s2 + $0x10] sm:$0xff]
  %v43 = vld [vmem:[%s2 + $0x18] sm:$0xff]
  %v44 = vld [vmem:[%s2 + $0x20] sm:$0xff]
  %v45 = vld [vmem:[%s2 + $0x28] sm:$0xff]
  %v46 = vld [vmem:[%s2 + $0x30] sm:$0xff]
  %v47 = vld [vmem:[%s2 + $0x38] sm:$0xff]
  %v48 = vld [vmem:[%s2 + $0x40] sm:$0xff]
  %v49 = vld [vmem:[%s2 + $0x48] sm:$0xff]
  %v50 = vld [vmem:[%s2 + $0x50] sm:$0xff]
  %v51 = vld [vmem:[%s2 + $0x58] sm:$0xff]
  %v52 = vld [vmem:[%s2 + $0x60] sm:$0xff]
  %v53 = vld [vmem:[%s2 + $0x68] sm:$0xff]
  %v54 = vld [vmem:[%s2 + $0x70] sm:$0xff]
  %v55 = vld [vmem:[%s2 + $0x78] sm:$0xff]
  %v56 = vld [vmem:[%s2 + $0x80] sm:$0xff]
  %v57 = vld [vmem:[%s2 + $0x88] sm:$0xff]
  %v58 = vld [vmem:[%s2 + $0x90] sm:$0xff]
  %v59 = vld [vmem:[%s2 + $0x98] sm:$0xff]
  %v60 = vld [vmem:[%s2 + $0xa0] sm:$0xff]
  %v61 = vld [vmem:[%s2 + $0xa8] sm:$0xff]
  %v62 = vld [vmem:[%s2 + $0xb0] sm:$0xff]
  %v63 = vld [vmem:[%s2 + $0xb8] sm:$0xff]
  %v64 = vld [vmem:[%s2 + $0xc0] sm:$0xff]
  %v65 = vld [vmem:[%s2 + $0xc8] sm:$0xff]
  %v66 = vld [vmem:[%s2 + $0xd0] sm:$0xff]
  %v67 = vld [vmem:[%s2 + $0xd8] sm:$0xff]
  %v68 = vld [vmem:[%s2 + $0xe0] sm:$0xff]
  %v69 = vld [vmem:[%s2 + $0xe8] sm:$0xff]
  %v70 = vld [vmem:[%s2 + $0xf0] sm:$0xff]
  %v71 = vld [vmem:[%s2 + $0xf8] sm:$0xff]
  %v72 = vld [vmem:[%s2 + $0x100] sm:$0xff]
  %v73 = vld [vmem:[%s2 + $0x108] sm:$0xff]
  %v74 = vld [vmem:[%s2 + $0x110] sm:$0xff]
  %v75 = vld [vmem:[%s2 + $0x118] sm:$0xff]
  %v76 = vld [vmem:[%s2 + $0x120] sm:$0xff]
  %v77 = vld [vmem:[%s2 + $0x128] sm:$0xff]
  %v78 = vld [vmem:[%s2 + $0x130] sm:$0xff]
  %v79 = vld [vmem:[%s2 + $0x138] sm:$0xff]
  %v80 = vld [vmem:[%s2 + $0x140] sm:$0xff]
  %v81 = vld [vmem:[%s2 + $0x148] sm:$0xff]
  %v82 = vld [vmem:[%s2 + $0x150] sm:$0xff]
  %v83 = vld [vmem:[%s2 + $0x158] sm:$0xff]
  %v84 = vld [vmem:[%s2 + $0x160] sm:$0xff]
  %v85 = vld [vmem:[%s2 + $0x168] sm:$0xff]
  %v86 = vld [vmem:[%s2 + $0x170] sm:$0xff]
  %v87 = vld [vmem:[%s2 + $0x178] sm:$0xff]
  %v88 = vld [vmem:[%s2 + $0x180] sm:$0xff]
  %v89 = vld [vmem:[%s2 + $0x188] sm:$0xff]
  %v90 = vld [vmem:[%s2 + $0x190] sm:$0xff]
  %v91 = vld [vmem:[%s2 + $0x198] sm:$0xff]
  %v92 = vld [vmem:[%s2 + $0x1a0] sm:$0xff]
  %v93 = vld [vmem:[%s2 + $0x1a8] sm:$0xff]
  %v94 = vld [vmem:[%s2 + $0x1b0] sm:$0xff]
  %v95 = vld [vmem:[%s2 + $0x1b8] sm:$0xff]
  %v96 = vld [vmem:[%s2 + $0x1c0] sm:$0xff]
  %v97 = vld [vmem:[%s2 + $0x1c8] sm:$0xff]
  %v98 = vld [vmem:[%s2 + $0x1d0] sm:$0xff]
  %v99 = vld [vmem:[%s2 + $0x1d8] sm:$0xff]
  %v100 = vld [vmem:[%s2 + $0x1e0] sm:$0xff]
  %v101 = vld [vmem:[%s2 + $0x1e8] sm:$0xff]
  %v102 = vld [vmem:[%s2 + $0x1f0] sm:$0xff]
  %v103 = vld [vmem:[%s2 + $0x1f8] sm:$0xff]
  %v104 = vld [vmem:[%s3] sm:$0xff]
  %v105 = vld [vmem:[%s3 + $0x8] sm:$0xff]
  %v106 = vld [vmem:[%s3 + $0x10] sm:$0xff]
  %v107 = vld [vmem:[%s3 + $0x18] sm:$0xff]
  %v108 = vld [vmem:[%s3 + $0x20] sm:$0xff]
  %v109 = vld [vmem:[%s3 + $0x28] sm:$0xff]
  %v110 = vld [vmem:[%s3 + $0x30] sm:$0xff]
  %v111 = vld [vmem:[%s3 + $0x38] sm:$0xff]
  %v112 = vld [vmem:[%s3 + $0x40] sm:$0xff]
  %v113 = vld [vmem:[%s3 + $0x48] sm:$0xff]
  %v114 = vld [vmem:[%s3 + $0x50] sm:$0xff]
  %v115 = vld [vmem:[%s3 + $0x58] sm:$0xff]
  %v116 = vld [vmem:[%s3 + $0x60] sm:$0xff]
  %v117 = vld [vmem:[%s3 + $0x68] sm:$0xff]
  %v118 = vld [vmem:[%s3 + $0x70] sm:$0xff]
  %v119 = vld [vmem:[%s3 + $0x78] sm:$0xff]
  %v120 = vld [vmem:[%s3 + $0x80] sm:$0xff]
  %v121 = vld [vmem:[%s3 + $0x88] sm:$0xff]
  %v122 = vld [vmem:[%s3 + $0x90] sm:$0xff]
  %v123 = vld [vmem:[%s3 + $0x98] sm:$0xff]
  %v124 = vld [vmem:[%s3 + $0xa0] sm:$0xff]
  %v125 = vld [vmem:[%s3 + $0xa8] sm:$0xff]
  %v126 = vld [vmem:[%s3 + $0xb0] sm:$0xff]
  %v127 = vld [vmem:[%s3 + $0xb8] sm:$0xff]
  %v128 = vld [vmem:[%s3 + $0xc0] sm:$0xff]
  %v129 = vld [vmem:[%s3 + $0xc8] sm:$0xff]
  %v130 = vld [vmem:[%s3 + $0xd0] sm:$0xff]
  %v131 = vld [vmem:[%s3 + $0xd8] sm:$0xff]
  %v132 = vld [vmem:[%s3 + $0xe0] sm:$0xff]
  %v133 = vld [vmem:[%s3 + $0xe8] sm:$0xff]
  %v134 = vld [vmem:[%s3 + $0xf0] sm:$0xff]
  %v135 = vld [vmem:[%s3 + $0xf8] sm:$0xff]
  %v136 = vld [vmem:[%s3 + $0x100] sm:$0xff]
  %v137 = vld [vmem:[%s3 + $0x108] sm:$0xff]
  %v138 = vld [vmem:[%s3 + $0x110] sm:$0xff]
  %v139 = vld [vmem:[%s3 + $0x118] sm:$0xff]
  %v140 = vld [vmem:[%s3 + $0x120] sm:$0xff]
  %v141 = vld [vmem:[%s3 + $0x128] sm:$0xff]
  %v142 = vld [vmem:[%s3 + $0x130] sm:$0xff]
  %v143 = vld [vmem:[%s3 + $0x138] sm:$0xff]
  %v144 = vld [vmem:[%s3 + $0x140] sm:$0xff]
  %v145 = vld [vmem:[%s3 + $0x148] sm:$0xff]
  %v146 = vld [vmem:[%s3 + $0x150] sm:$0xff]
  %v147 = vld [vmem:[%s3 + $0x158] sm:$0xff]
  %v148 = vld [vmem:[%s3 + $0x160] sm:$0xff]
  %v149 = vld [vmem:[%s3 + $0x168] sm:$0xff]
  %v150 = vld [vmem:[%s3 + $0x170] sm:$0xff]
  %v151 = vld [vmem:[%s3 + $0x178] sm:$0xff]
  %v152 = vld [vmem:[%s3 + $0x180] sm:$0xff]
  %v153 = vld [vmem:[%s3 + $0x188] sm:$0xff]
  %v154 = vld [vmem:[%s3 + $0x190] sm:$0xff]
  %v155 = vld [vmem:[%s3 + $0x198] sm:$0xff]
  %v156 = vld [vmem:[%s3 + $0x1a0] sm:$0xff]
  %v157 = vld [vmem:[%s3 + $0x1a8] sm:$0xff]
  %v158 = vld [vmem:[%s3 + $0x1b0] sm:$0xff]
  %v159 = vld [vmem:[%s3 + $0x1b8] sm:$0xff]
  %v160 = vld [vmem:[%s3 + $0x1c0] sm:$0xff]
  %v161 = vld [vmem:[%s3 + $0x1c8] sm:$0xff]
  %v162 = vld [vmem:[%s3 + $0x1d0] sm:$0xff]
  %v163 = vld [vmem:[%s3 + $0x1d8] sm:$0xff]
  %v164 = vld [vmem:[%s3 + $0x1e0] sm:$0xff]
  %v165 = vld [vmem:[%s3 + $0x1e8] sm:$0xff]
  %v166 = vld [vmem:[%s3 + $0x1f0] sm:$0xff]
  %v167 = vld [vmem:[%s3 + $0x1f8] sm:$0xff]
  %v168 = vld [vmem:[%s0] sm:$0xff]
  %v169 = vld [vmem:[%s0 + $0x8] sm:$0xff]
  %v170 = vld [vmem:[%s1] sm:$0xff]
  %v171 = vld [vmem:[%s1 + $0x8] sm:$0xff]
  %172 = vmatprep.subr.mxu0 %v41
  %173 = vmatpush1.msra.mxu0 %v40
  %174 = vmatprep.subr.mxu0 %v43
  %175 = vmatpush1.msra.mxu0 %v42
  %176 = vmatprep.subr.mxu0 %v45
  %177 = vmatpush1.msra.mxu0 %v44
  %178 = vmatprep.subr.mxu0 %v47
  %179 = vmatpush1.msra.mxu0 %v46
  %180 = vmatprep.subr.mxu0 %v49
  %181 = vmatpush1.msra.mxu0 %v48
  %182 = vmatprep.subr.mxu0 %v51
  %183 = vmatpush1.msra.mxu0 %v50
  %184 = vmatprep.subr.mxu0 %v53
  %185 = vmatpush1.msra.mxu0 %v52
  %186 = vmatprep.subr.mxu0 %v55
  %187 = vmatpush1.msra.mxu0 %v54
  %188 = vmatprep.subr.mxu0 %v57
  %189 = vmatpush1.msra.mxu0 %v56
  %190 = vmatprep.subr.mxu0 %v59
  %191 = vmatpush1.msra.mxu0 %v58
  %192 = vmatprep.subr.mxu0 %v61
  %193 = vmatpush1.msra.mxu0 %v60
  %194 = vmatprep.subr.mxu0 %v63
  %195 = vmatpush1.msra.mxu0 %v62
  %196 = vmatprep.subr.mxu0 %v65
  %197 = vmatpush1.msra.mxu0 %v64
  %198 = vmatprep.subr.mxu0 %v67
  %199 = vmatpush1.msra.mxu0 %v66
  %200 = vmatprep.subr.mxu0 %v69
  %201 = vmatpush1.msra.mxu0 %v68
  %202 = vmatprep.subr.mxu0 %v71
  %203 = vmatpush1.msra.mxu0 %v70
  %204 = vmatprep.subr.mxu0 %v73
  %205 = vmatpush1.msra.mxu0 %v72
  %206 = vmatprep.subr.mxu0 %v75
  %207 = vmatpush1.msra.mxu0 %v74
  %208 = vmatprep.subr.mxu0 %v77
  %209 = vmatpush1.msra.mxu0 %v76
  %210 = vmatprep.subr.mxu0 %v79
  %211 = vmatpush1.msra.mxu0 %v78
  %212 = vmatprep.subr.mxu0 %v81
  %213 = vmatpush1.msra.mxu0 %v80
  %214 = vmatprep.subr.mxu0 %v83
  %215 = vmatpush1.msra.mxu0 %v82
  %216 = vmatprep.subr.mxu0 %v85
  %217 = vmatpush1.msra.mxu0 %v84
  %218 = vmatprep.subr.mxu0 %v87
  %219 = vmatpush1.msra.mxu0 %v86
  %220 = vmatprep.subr.mxu0 %v89
  %221 = vmatpush1.msra.mxu0 %v88
  %222 = vmatprep.subr.mxu0 %v91
  %223 = vmatpush1.msra.mxu0 %v90
  %224 = vmatprep.subr.mxu0 %v93
  %225 = vmatpush1.msra.mxu0 %v92
  %226 = vmatprep.subr.mxu0 %v95
  %227 = vmatpush1.msra.mxu0 %v94
  %228 = vmatprep.subr.mxu0 %v97
  %229 = vmatpush1.msra.mxu0 %v96
  %230 = vmatprep.subr.mxu0 %v99
  %231 = vmatpush1.msra.mxu0 %v98
  %232 = vmatprep.subr.mxu0 %v101
  %233 = vmatpush1.msra.mxu0 %v100
  %234 = vmatprep.subr.mxu0 %v103
  %235 = vmatpush1.msra.mxu0 %v102
  %236 = vmatprep.mubr.f32.mxu0 %v169
  %237 = vmatmul.mubr.f32.gmra.mrb[0].mxu0 %v168
  %v238 = vpop.f32.mrb[0].mxu0
  %v239 = vadd.f32 0.0, %v238
  %v240 = vpop.f32.mrb[0].mxu0
  %v241 = vadd.f32 0.0, %v240
  %242 = vdwg.mxu0
  %243 = vmatprep.subr.mxu0 %v105
  %244 = vmatpush1.msra.mxu0 %v104
  %245 = vmatprep.subr.mxu0 %v107
  %246 = vmatpush1.msra.mxu0 %v106
  %247 = vmatprep.subr.mxu0 %v109
  %248 = vmatpush1.msra.mxu0 %v108
  %249 = vmatprep.subr.mxu0 %v111
  %250 = vmatpush1.msra.mxu0 %v110
  %251 = vmatprep.subr.mxu0 %v113
  %252 = vmatpush1.msra.mxu0 %v112
  %253 = vmatprep.subr.mxu0 %v115
  %254 = vmatpush1.msra.mxu0 %v114
  %255 = vmatprep.subr.mxu0 %v117
  %256 = vmatpush1.msra.mxu0 %v116
  %257 = vmatprep.subr.mxu0 %v119
  %258 = vmatpush1.msra.mxu0 %v118
  %259 = vmatprep.subr.mxu0 %v121
  %260 = vmatpush1.msra.mxu0 %v120
  %261 = vmatprep.subr.mxu0 %v123
  %262 = vmatpush1.msra.mxu0 %v122
  %263 = vmatprep.subr.mxu0 %v125
  %264 = vmatpush1.msra.mxu0 %v124
  %265 = vmatprep.subr.mxu0 %v127
  %266 = vmatpush1.msra.mxu0 %v126
  %267 = vmatprep.subr.mxu0 %v129
  %268 = vmatpush1.msra.mxu0 %v128
  %269 = vmatprep.subr.mxu0 %v131
  %270 = vmatpush1.msra.mxu0 %v130
  %271 = vmatprep.subr.mxu0 %v133
  %272 = vmatpush1.msra.mxu0 %v132
  %273 = vmatprep.subr.mxu0 %v135
  %274 = vmatpush1.msra.mxu0 %v134
  %275 = vmatprep.subr.mxu0 %v137
  %276 = vmatpush1.msra.mxu0 %v136
  %277 = vmatprep.subr.mxu0 %v139
  %278 = vmatpush1.msra.mxu0 %v138
  %279 = vmatprep.subr.mxu0 %v141
  %280 = vmatpush1.msra.mxu0 %v140
  %281 = vmatprep.subr.mxu0 %v143
  %282 = vmatpush1.msra.mxu0 %v142
  %283 = vmatprep.subr.mxu0 %v145
  %284 = vmatpush1.msra.mxu0 %v144
  %285 = vmatprep.subr.mxu0 %v147
  %286 = vmatpush1.msra.mxu0 %v146
  %287 = vmatprep.subr.mxu0 %v149
  %288 = vmatpush1.msra.mxu0 %v148
  %289 = vmatprep.subr.mxu0 %v151
  %290 = vmatpush1.msra.mxu0 %v150
  %291 = vmatprep.subr.mxu0 %v153
  %292 = vmatpush1.msra.mxu0 %v152
  %293 = vmatprep.subr.mxu0 %v155
  %294 = vmatpush1.msra.mxu0 %v154
  %295 = vmatprep.subr.mxu0 %v157
  %296 = vmatpush1.msra.mxu0 %v156
  %297 = vmatprep.subr.mxu0 %v159
  %298 = vmatpush1.msra.mxu0 %v158
  %299 = vmatprep.subr.mxu0 %v161
  %300 = vmatpush1.msra.mxu0 %v160
  %301 = vmatprep.subr.mxu0 %v163
  %302 = vmatpush1.msra.mxu0 %v162
  %303 = vmatprep.subr.mxu0 %v165
  %304 = vmatpush1.msra.mxu0 %v164
  %305 = vmatprep.subr.mxu0 %v167
  %306 = vmatpush1.msra.mxu0 %v166
  %307 = vmatprep.mubr.f32.mxu0 %v171
  %308 = vmatmul.mubr.f32.gmra.mrb[0].mxu0 %v170
  %v309 = vpop.f32.mrb[0].mxu0
  %v310 = vadd.f32 0.0, %v309
  %v311 = vpop.f32.mrb[0].mxu0
  %v312 = vadd.f32 0.0, %v311
  %313 = vdwg.mxu0
  %v314 = vsub.f32 %v239, %v310
  %v315 = vsub.f32 %v241, %v312
  %316 = vmatprep.subr.mxu0 %v41
  %317 = vmatpush1.msra.mxu0 %v40
  %318 = vmatprep.subr.mxu0 %v43
  %319 = vmatpush1.msra.mxu0 %v42
  %320 = vmatprep.subr.mxu0 %v45
  %321 = vmatpush1.msra.mxu0 %v44
  %322 = vmatprep.subr.mxu0 %v47
  %323 = vmatpush1.msra.mxu0 %v46
  %324 = vmatprep.subr.mxu0 %v49
  %325 = vmatpush1.msra.mxu0 %v48
  %326 = vmatprep.subr.mxu0 %v51
  %327 = vmatpush1.msra.mxu0 %v50
  %328 = vmatprep.subr.mxu0 %v53
  %329 = vmatpush1.msra.mxu0 %v52
  %330 = vmatprep.subr.mxu0 %v55
  %331 = vmatpush1.msra.mxu0 %v54
  %332 = vmatprep.subr.mxu0 %v57
  %333 = vmatpush1.msra.mxu0 %v56
  %334 = vmatprep.subr.mxu0 %v59
  %335 = vmatpush1.msra.mxu0 %v58
  %336 = vmatprep.subr.mxu0 %v61
  %337 = vmatpush1.msra.mxu0 %v60
  %338 = vmatprep.subr.mxu0 %v63
  %339 = vmatpush1.msra.mxu0 %v62
  %340 = vmatprep.subr.mxu0 %v65
  %341 = vmatpush1.msra.mxu0 %v64
  %342 = vmatprep.subr.mxu0 %v67
  %343 = vmatpush1.msra.mxu0 %v66
  %344 = vmatprep.subr.mxu0 %v69
  %345 = vmatpush1.msra.mxu0 %v68
  %346 = vmatprep.subr.mxu0 %v71
  %347 = vmatpush1.msra.mxu0 %v70
  %348 = vmatprep.subr.mxu0 %v73
  %349 = vmatpush1.msra.mxu0 %v72
  %350 = vmatprep.subr.mxu0 %v75
  %351 = vmatpush1.msra.mxu0 %v74
  %352 = vmatprep.subr.mxu0 %v77
  %353 = vmatpush1.msra.mxu0 %v76
  %354 = vmatprep.subr.mxu0 %v79
  %355 = vmatpush1.msra.mxu0 %v78
  %356 = vmatprep.subr.mxu0 %v81
  %357 = vmatpush1.msra.mxu0 %v80
  %358 = vmatprep.subr.mxu0 %v83
  %359 = vmatpush1.msra.mxu0 %v82
  %360 = vmatprep.subr.mxu0 %v85
  %361 = vmatpush1.msra.mxu0 %v84
  %362 = vmatprep.subr.mxu0 %v87
  %363 = vmatpush1.msra.mxu0 %v86
  %364 = vmatprep.subr.mxu0 %v89
  %365 = vmatpush1.msra.mxu0 %v88
  %366 = vmatprep.subr.mxu0 %v91
  %367 = vmatpush1.msra.mxu0 %v90
  %368 = vmatprep.subr.mxu0 %v93
  %369 = vmatpush1.msra.mxu0 %v92
  %370 = vmatprep.subr.mxu0 %v95
  %371 = vmatpush1.msra.mxu0 %v94
  %372 = vmatprep.subr.mxu0 %v97
  %373 = vmatpush1.msra.mxu0 %v96
  %374 = vmatprep.subr.mxu0 %v99
  %375 = vmatpush1.msra.mxu0 %v98
  %376 = vmatprep.subr.mxu0 %v101
  %377 = vmatpush1.msra.mxu0 %v100
  %378 = vmatprep.subr.mxu0 %v103
  %379 = vmatpush1.msra.mxu0 %v102
  %380 = vmatprep.mubr.f32.mxu0 %v171
  %381 = vmatmul.mubr.f32.gmra.mrb[0].mxu0 %v170
  %v382 = vpop.f32.mrb[0].mxu0
  %v383 = vadd.f32 0.0, %v382
  %v384 = vpop.f32.mrb[0].mxu0
  %v385 = vadd.f32 0.0, %v384
  %386 = vdwg.mxu0
  %387 = vmatprep.subr.mxu0 %v105
  %388 = vmatpush1.msra.mxu0 %v104
  %389 = vmatprep.subr.mxu0 %v107
  %390 = vmatpush1.msra.mxu0 %v106
  %391 = vmatprep.subr.mxu0 %v109
  %392 = vmatpush1.msra.mxu0 %v108
  %393 = vmatprep.subr.mxu0 %v111
  %394 = vmatpush1.msra.mxu0 %v110
  %395 = vmatprep.subr.mxu0 %v113
  %396 = vmatpush1.msra.mxu0 %v112
  %397 = vmatprep.subr.mxu0 %v115
  %398 = vmatpush1.msra.mxu0 %v114
  %399 = vmatprep.subr.mxu0 %v117
  %400 = vmatpush1.msra.mxu0 %v116
  %401 = vmatprep.subr.mxu0 %v119
  %402 = vmatpush1.msra.mxu0 %v118
  %403 = vmatprep.subr.mxu0 %v121
  %404 = vmatpush1.msra.mxu0 %v120
  %405 = vmatprep.subr.mxu0 %v123
  %406 = vmatpush1.msra.mxu0 %v122
  %407 = vmatprep.subr.mxu0 %v125
  %408 = vmatpush1.msra.mxu0 %v124
  %409 = vmatprep.subr.mxu0 %v127
  %410 = vmatpush1.msra.mxu0 %v126
  %411 = vmatprep.subr.mxu0 %v129
  %412 = vmatpush1.msra.mxu0 %v128
  %413 = vmatprep.subr.mxu0 %v131
  %414 = vmatpush1.msra.mxu0 %v130
  %415 = vmatprep.subr.mxu0 %v133
  %416 = vmatpush1.msra.mxu0 %v132
  %417 = vmatprep.subr.mxu0 %v135
  %418 = vmatpush1.msra.mxu0 %v134
  %419 = vmatprep.subr.mxu0 %v137
  %420 = vmatpush1.msra.mxu0 %v136
  %421 = vmatprep.subr.mxu0 %v139
  %422 = vmatpush1.msra.mxu0 %v138
  %423 = vmatprep.subr.mxu0 %v141
  %424 = vmatpush1.msra.mxu0 %v140
  %425 = vmatprep.subr.mxu0 %v143
  %426 = vmatpush1.msra.mxu0 %v142
  %427 = vmatprep.subr.mxu0 %v145
  %428 = vmatpush1.msra.mxu0 %v144
  %429 = vmatprep.subr.mxu0 %v147
  %430 = vmatpush1.msra.mxu0 %v146
  %431 = vmatprep.subr.mxu0 %v149
  %432 = vmatpush1.msra.mxu0 %v148
  %433 = vmatprep.subr.mxu0 %v151
  %434 = vmatpush1.msra.mxu0 %v150
  %435 = vmatprep.subr.mxu0 %v153
  %436 = vmatpush1.msra.mxu0 %v152
  %437 = vmatprep.subr.mxu0 %v155
  %438 = vmatpush1.msra.mxu0 %v154
  %439 = vmatprep.subr.mxu0 %v157
  %440 = vmatpush1.msra.mxu0 %v156
  %441 = vmatprep.subr.mxu0 %v159
  %442 = vmatpush1.msra.mxu0 %v158
  %443 = vmatprep.subr.mxu0 %v161
  %444 = vmatpush1.msra.mxu0 %v160
  %445 = vmatprep.subr.mxu0 %v163
  %446 = vmatpush1.msra.mxu0 %v162
  %447 = vmatprep.subr.mxu0 %v165
  %448 = vmatpush1.msra.mxu0 %v164
  %449 = vmatprep.subr.mxu0 %v167
  %450 = vmatpush1.msra.mxu0 %v166
  %451 = vmatprep.mubr.f32.mxu0 %v169
  %452 = vmatmul.mubr.f32.gmra.mrb[0].mxu0 %v168
  %v453 = vpop.f32.mrb[0].mxu0
  %v454 = vadd.f32 %v383, %v453
  %v455 = vpop.f32.mrb[0].mxu0
  %v456 = vadd.f32 %v385, %v455
  %457 = vdwg.mxu0
  %v458 = vld [vmem:[%s4] sm:$0xff]
  %v459 = vld [vmem:[%s4 + $0x8] sm:$0xff]
  %v460 = vld [vmem:[%s5] sm:$0xff]
  %v461 = vld [vmem:[%s5 + $0x8] sm:$0xff]
  %v462 = vmul.f32 %v314, %v458
  %v463 = vmul.f32 %v315, %v459
  %v464 = vmul.f32 %v454, %v460
  %v465 = vmul.f32 %v456, %v461
  %v466 = vsub.f32 %v462, %v464
  %v467 = vsub.f32 %v463, %v465
  %v468 = vmul.f32 %v314, %v460
  %v469 = vmul.f32 %v315, %v461
  %v470 = vmul.f32 %v454, %v458
  %v471 = vmul.f32 %v456, %v459
  %v472 = vadd.f32 %v468, %v470
  %v473 = vadd.f32 %v469, %v471
  %v474 = vld [vmem:[%s6] sm:$0xff]
  %v475 = vld [vmem:[%s6 + $0x8] sm:$0xff]
  %v476 = vld [vmem:[%s7] sm:$0xff]
  %v477 = vld [vmem:[%s7 + $0x8] sm:$0xff]
  %v478 = vmul.f32 %v314, %v474
  %v479 = vmul.f32 %v315, %v475
  %v480 = vmul.f32 %v454, %v476
  %v481 = vmul.f32 %v456, %v477
  %v482 = vsub.f32 %v478, %v480
  %v483 = vsub.f32 %v479, %v481
  %v484 = vld [vmem:[%s8] sm:$0xff]
  %v485 = vld [vmem:[%s8 + $0x8] sm:$0xff]
  %v486 = vadd.f32 %v482, %v484
  %v487 = vadd.f32 %v483, %v485
  %v488 = vmul.f32 %v314, %v476
  %v489 = vmul.f32 %v315, %v477
  %v490 = vmul.f32 %v454, %v474
  %v491 = vmul.f32 %v456, %v475
  %v492 = vadd.f32 %v488, %v490
  %v493 = vadd.f32 %v489, %v491
  %v494 = vld [vmem:[%s9] sm:$0xff]
  %v495 = vld [vmem:[%s9 + $0x8] sm:$0xff]
  %v496 = vadd.f32 %v492, %v494
  %v497 = vadd.f32 %v493, %v495
  %s498 = scalar_lea.vmem %s6, 16
  %v499 = vld [vmem:[%s498] sm:$0xff]
  %v500 = vld [vmem:[%s498 + $0x8] sm:$0xff]
  %s501 = scalar_lea.vmem %s7, 16
  %v502 = vld [vmem:[%s501] sm:$0xff]
  %v503 = vld [vmem:[%s501 + $0x8] sm:$0xff]
  %v504 = vmul.f32 %v486, %v499
  %v505 = vmul.f32 %v487, %v500
  %v506 = vmul.f32 %v496, %v502
  %v507 = vmul.f32 %v497, %v503
  %v508 = vsub.f32 %v504, %v506
  %v509 = vsub.f32 %v505, %v507
  %s510 = scalar_lea.vmem %s8, 16
  %v511 = vld [vmem:[%s510] sm:$0xff]
  %v512 = vld [vmem:[%s510 + $0x8] sm:$0xff]
  %v513 = vadd.f32 %v508, %v511
  %v514 = vadd.f32 %v509, %v512
  %v515 = vmul.f32 %v486, %v502
  %v516 = vmul.f32 %v487, %v503
  %v517 = vmul.f32 %v496, %v499
  %v518 = vmul.f32 %v497, %v500
  %v519 = vadd.f32 %v515, %v517
  %v520 = vadd.f32 %v516, %v518
  %s521 = scalar_lea.vmem %s9, 16
  %v522 = vld [vmem:[%s521] sm:$0xff]
  %v523 = vld [vmem:[%s521 + $0x8] sm:$0xff]
  %v524 = vadd.f32 %v519, %v522
  %v525 = vadd.f32 %v520, %v523
  %526 = vmatprep.subr.mxu0 %v105
  %527 = vmatpush1.msra.mxu0 %v104
  %528 = vmatprep.subr.mxu0 %v107
  %529 = vmatpush1.msra.mxu0 %v106
  %530 = vmatprep.subr.mxu0 %v109
  %531 = vmatpush1.msra.mxu0 %v108
  %532 = vmatprep.subr.mxu0 %v111
  %533 = vmatpush1.msra.mxu0 %v110
  %534 = vmatprep.subr.mxu0 %v113
  %535 = vmatpush1.msra.mxu0 %v112
  %536 = vmatprep.subr.mxu0 %v115
  %537 = vmatpush1.msra.mxu0 %v114
  %538 = vmatprep.subr.mxu0 %v117
  %539 = vmatpush1.msra.mxu0 %v116
  %540 = vmatprep.subr.mxu0 %v119
  %541 = vmatpush1.msra.mxu0 %v118
  %542 = vmatprep.subr.mxu0 %v121
  %543 = vmatpush1.msra.mxu0 %v120
  %544 = vmatprep.subr.mxu0 %v123
  %545 = vmatpush1.msra.mxu0 %v122
  %546 = vmatprep.subr.mxu0 %v125
  %547 = vmatpush1.msra.mxu0 %v124
  %548 = vmatprep.subr.mxu0 %v127
  %549 = vmatpush1.msra.mxu0 %v126
  %550 = vmatprep.subr.mxu0 %v129
  %551 = vmatpush1.msra.mxu0 %v128
  %552 = vmatprep.subr.mxu0 %v131
  %553 = vmatpush1.msra.mxu0 %v130
  %554 = vmatprep.subr.mxu0 %v133
  %555 = vmatpush1.msra.mxu0 %v132
  %556 = vmatprep.subr.mxu0 %v135
  %557 = vmatpush1.msra.mxu0 %v134
  %558 = vmatprep.subr.mxu0 %v137
  %559 = vmatpush1.msra.mxu0 %v136
  %560 = vmatprep.subr.mxu0 %v139
  %561 = vmatpush1.msra.mxu0 %v138
  %562 = vmatprep.subr.mxu0 %v141
  %563 = vmatpush1.msra.mxu0 %v140
  %564 = vmatprep.subr.mxu0 %v143
  %565 = vmatpush1.msra.mxu0 %v142
  %566 = vmatprep.subr.mxu0 %v145
  %567 = vmatpush1.msra.mxu0 %v144
  %568 = vmatprep.subr.mxu0 %v147
  %569 = vmatpush1.msra.mxu0 %v146
  %570 = vmatprep.subr.mxu0 %v149
  %571 = vmatpush1.msra.mxu0 %v148
  %572 = vmatprep.subr.mxu0 %v151
  %573 = vmatpush1.msra.mxu0 %v150
  %574 = vmatprep.subr.mxu0 %v153
  %575 = vmatpush1.msra.mxu0 %v152
  %576 = vmatprep.subr.mxu0 %v155
  %577 = vmatpush1.msra.mxu0 %v154
  %578 = vmatprep.subr.mxu0 %v157
  %579 = vmatpush1.msra.mxu0 %v156
  %580 = vmatprep.subr.mxu0 %v159
  %581 = vmatpush1.msra.mxu0 %v158
  %582 = vmatprep.subr.mxu0 %v161
  %583 = vmatpush1.msra.mxu0 %v160
  %584 = vmatprep.subr.mxu0 %v163
  %585 = vmatpush1.msra.mxu0 %v162
  %586 = vmatprep.subr.mxu0 %v165
  %587 = vmatpush1.msra.mxu0 %v164
  %588 = vmatprep.subr.mxu0 %v167
  %589 = vmatpush1.msra.mxu0 %v166
  %590 = vmatprep.mubr.f32.mxu0 %v525
  %591 = vmatmul.mubr.f32.gmra.mrb[0].mxu0 %v524
  %v592 = vpop.f32.mrb[0].mxu0
  %v593 = vadd.f32 0.0, %v592
  %v594 = vpop.f32.mrb[0].mxu0
  %v595 = vadd.f32 0.0, %v594
  %596 = vdwg.mxu0
  %597 = vmatprep.subr.mxu0 %v41
  %598 = vmatpush1.msra.mxu0 %v40
  %599 = vmatprep.subr.mxu0 %v43
  %600 = vmatpush1.msra.mxu0 %v42
  %601 = vmatprep.subr.mxu0 %v45
  %602 = vmatpush1.msra.mxu0 %v44
  %603 = vmatprep.subr.mxu0 %v47
  %604 = vmatpush1.msra.mxu0 %v46
  %605 = vmatprep.subr.mxu0 %v49
  %606 = vmatpush1.msra.mxu0 %v48
  %607 = vmatprep.subr.mxu0 %v51
  %608 = vmatpush1.msra.mxu0 %v50
  %609 = vmatprep.subr.mxu0 %v53
  %610 = vmatpush1.msra.mxu0 %v52
  %611 = vmatprep.subr.mxu0 %v55
  %612 = vmatpush1.msra.mxu0 %v54
  %613 = vmatprep.subr.mxu0 %v57
  %614 = vmatpush1.msra.mxu0 %v56
  %615 = vmatprep.subr.mxu0 %v59
  %616 = vmatpush1.msra.mxu0 %v58
  %617 = vmatprep.subr.mxu0 %v61
  %618 = vmatpush1.msra.mxu0 %v60
  %619 = vmatprep.subr.mxu0 %v63
  %620 = vmatpush1.msra.mxu0 %v62
  %621 = vmatprep.subr.mxu0 %v65
  %622 = vmatpush1.msra.mxu0 %v64
  %623 = vmatprep.subr.mxu0 %v67
  %624 = vmatpush1.msra.mxu0 %v66
  %625 = vmatprep.subr.mxu0 %v69
  %626 = vmatpush1.msra.mxu0 %v68
  %627 = vmatprep.subr.mxu0 %v71
  %628 = vmatpush1.msra.mxu0 %v70
  %629 = vmatprep.subr.mxu0 %v73
  %630 = vmatpush1.msra.mxu0 %v72
  %631 = vmatprep.subr.mxu0 %v75
  %632 = vmatpush1.msra.mxu0 %v74
  %633 = vmatprep.subr.mxu0 %v77
  %634 = vmatpush1.msra.mxu0 %v76
  %635 = vmatprep.subr.mxu0 %v79
  %636 = vmatpush1.msra.mxu0 %v78
  %637 = vmatprep.subr.mxu0 %v81
  %638 = vmatpush1.msra.mxu0 %v80
  %639 = vmatprep.subr.mxu0 %v83
  %640 = vmatpush1.msra.mxu0 %v82
  %641 = vmatprep.subr.mxu0 %v85
  %642 = vmatpush1.msra.mxu0 %v84
  %643 = vmatprep.subr.mxu0 %v87
  %644 = vmatpush1.msra.mxu0 %v86
  %645 = vmatprep.subr.mxu0 %v89
  %646 = vmatpush1.msra.mxu0 %v88
  %647 = vmatprep.subr.mxu0 %v91
  %648 = vmatpush1.msra.mxu0 %v90
  %649 = vmatprep.subr.mxu0 %v93
  %650 = vmatpush1.msra.mxu0 %v92
  %651 = vmatprep.subr.mxu0 %v95
  %652 = vmatpush1.msra.mxu0 %v94
  %653 = vmatprep.subr.mxu0 %v97
  %654 = vmatpush1.msra.mxu0 %v96
  %655 = vmatprep.subr.mxu0 %v99
  %656 = vmatpush1.msra.mxu0 %v98
  %657 = vmatprep.subr.mxu0 %v101
  %658 = vmatpush1.msra.mxu0 %v100
  %659 = vmatprep.subr.mxu0 %v103
  %660 = vmatpush1.msra.mxu0 %v102
  %661 = vmatprep.mubr.f32.mxu0 %v514
  %662 = vmatmul.mubr.f32.gmra.mrb[0].mxu0 %v513
  %v663 = vpop.f32.mrb[0].mxu0
  %v664 = vadd.f32 %v593, %v663
  %v665 = vpop.f32.mrb[0].mxu0
  %v666 = vadd.f32 %v595, %v665
  %667 = vdwg.mxu0
  %v668 = vmul.f32 %v664, 0.00390625
  %v669 = vmul.f32 %v666, 0.00390625
  %670 = vmatprep.subr.mxu0 %v41
  %671 = vmatpush1.msra.mxu0 %v40
  %672 = vmatprep.subr.mxu0 %v43
  %673 = vmatpush1.msra.mxu0 %v42
  %674 = vmatprep.subr.mxu0 %v45
  %675 = vmatpush1.msra.mxu0 %v44
  %676 = vmatprep.subr.mxu0 %v47
  %677 = vmatpush1.msra.mxu0 %v46
  %678 = vmatprep.subr.mxu0 %v49
  %679 = vmatpush1.msra.mxu0 %v48
  %680 = vmatprep.subr.mxu0 %v51
  %681 = vmatpush1.msra.mxu0 %v50
  %682 = vmatprep.subr.mxu0 %v53
  %683 = vmatpush1.msra.mxu0 %v52
  %684 = vmatprep.subr.mxu0 %v55
  %685 = vmatpush1.msra.mxu0 %v54
  %686 = vmatprep.subr.mxu0 %v57
  %687 = vmatpush1.msra.mxu0 %v56
  %688 = vmatprep.subr.mxu0 %v59
  %689 = vmatpush1.msra.mxu0 %v58
  %690 = vmatprep.subr.mxu0 %v61
  %691 = vmatpush1.msra.mxu0 %v60
  %692 = vmatprep.subr.mxu0 %v63
  %693 = vmatpush1.msra.mxu0 %v62
  %694 = vmatprep.subr.mxu0 %v65
  %695 = vmatpush1.msra.mxu0 %v64
  %696 = vmatprep.subr.mxu0 %v67
  %697 = vmatpush1.msra.mxu0 %v66
  %698 = vmatprep.subr.mxu0 %v69
  %699 = vmatpush1.msra.mxu0 %v68
  %700 = vmatprep.subr.mxu0 %v71
  %701 = vmatpush1.msra.mxu0 %v70
  %702 = vmatprep.subr.mxu0 %v73
  %703 = vmatpush1.msra.mxu0 %v72
  %704 = vmatprep.subr.mxu0 %v75
  %705 = vmatpush1.msra.mxu0 %v74
  %706 = vmatprep.subr.mxu0 %v77
  %707 = vmatpush1.msra.mxu0 %v76
  %708 = vmatprep.subr.mxu0 %v79
  %709 = vmatpush1.msra.mxu0 %v78
  %710 = vmatprep.subr.mxu0 %v81
  %711 = vmatpush1.msra.mxu0 %v80
  %712 = vmatprep.subr.mxu0 %v83
  %713 = vmatpush1.msra.mxu0 %v82
  %714 = vmatprep.subr.mxu0 %v85
  %715 = vmatpush1.msra.mxu0 %v84
  %716 = vmatprep.subr.mxu0 %v87
  %717 = vmatpush1.msra.mxu0 %v86
  %718 = vmatprep.subr.mxu0 %v89
  %719 = vmatpush1.msra.mxu0 %v88
  %720 = vmatprep.subr.mxu0 %v91
  %721 = vmatpush1.msra.mxu0 %v90
  %722 = vmatprep.subr.mxu0 %v93
  %723 = vmatpush1.msra.mxu0 %v92
  %724 = vmatprep.subr.mxu0 %v95
  %725 = vmatpush1.msra.mxu0 %v94
  %726 = vmatprep.subr.mxu0 %v97
  %727 = vmatpush1.msra.mxu0 %v96
  %728 = vmatprep.subr.mxu0 %v99
  %729 = vmatpush1.msra.mxu0 %v98
  %730 = vmatprep.subr.mxu0 %v101
  %731 = vmatpush1.msra.mxu0 %v100
  %732 = vmatprep.subr.mxu0 %v103
  %733 = vmatpush1.msra.mxu0 %v102
  %734 = vmatprep.mubr.f32.mxu0 %v525
  %735 = vmatmul.mubr.f32.gmra.mrb[0].mxu0 %v524
  %v736 = vpop.f32.mrb[0].mxu0
  %v737 = vadd.f32 0.0, %v736
  %v738 = vpop.f32.mrb[0].mxu0
  %v739 = vadd.f32 0.0, %v738
  %740 = vdwg.mxu0
  %741 = vmatprep.subr.mxu0 %v105
  %742 = vmatpush1.msra.mxu0 %v104
  %743 = vmatprep.subr.mxu0 %v107
  %744 = vmatpush1.msra.mxu0 %v106
  %745 = vmatprep.subr.mxu0 %v109
  %746 = vmatpush1.msra.mxu0 %v108
  %747 = vmatprep.subr.mxu0 %v111
  %748 = vmatpush1.msra.mxu0 %v110
  %749 = vmatprep.subr.mxu0 %v113
  %750 = vmatpush1.msra.mxu0 %v112
  %751 = vmatprep.subr.mxu0 %v115
  %752 = vmatpush1.msra.mxu0 %v114
  %753 = vmatprep.subr.mxu0 %v117
  %754 = vmatpush1.msra.mxu0 %v116
  %755 = vmatprep.subr.mxu0 %v119
  %756 = vmatpush1.msra.mxu0 %v118
  %757 = vmatprep.subr.mxu0 %v121
  %758 = vmatpush1.msra.mxu0 %v120
  %759 = vmatprep.subr.mxu0 %v123
  %760 = vmatpush1.msra.mxu0 %v122
  %761 = vmatprep.subr.mxu0 %v125
  %762 = vmatpush1.msra.mxu0 %v124
  %763 = vmatprep.subr.mxu0 %v127
  %764 = vmatpush1.msra.mxu0 %v126
  %765 = vmatprep.subr.mxu0 %v129
  %766 = vmatpush1.msra.mxu0 %v128
  %767 = vmatprep.subr.mxu0 %v131
  %768 = vmatpush1.msra.mxu0 %v130
  %769 = vmatprep.subr.mxu0 %v133
  %770 = vmatpush1.msra.mxu0 %v132
  %771 = vmatprep.subr.mxu0 %v135
  %772 = vmatpush1.msra.mxu0 %v134
  %773 = vmatprep.subr.mxu0 %v137
  %774 = vmatpush1.msra.mxu0 %v136
  %775 = vmatprep.subr.mxu0 %v139
  %776 = vmatpush1.msra.mxu0 %v138
  %777 = vmatprep.subr.mxu0 %v141
  %778 = vmatpush1.msra.mxu0 %v140
  %779 = vmatprep.subr.mxu0 %v143
  %780 = vmatpush1.msra.mxu0 %v142
  %781 = vmatprep.subr.mxu0 %v145
  %782 = vmatpush1.msra.mxu0 %v144
  %783 = vmatprep.subr.mxu0 %v147
  %784 = vmatpush1.msra.mxu0 %v146
  %785 = vmatprep.subr.mxu0 %v149
  %786 = vmatpush1.msra.mxu0 %v148
  %787 = vmatprep.subr.mxu0 %v151
  %788 = vmatpush1.msra.mxu0 %v150
  %789 = vmatprep.subr.mxu0 %v153
  %790 = vmatpush1.msra.mxu0 %v152
  %791 = vmatprep.subr.mxu0 %v155
  %792 = vmatpush1.msra.mxu0 %v154
  %793 = vmatprep.subr.mxu0 %v157
  %794 = vmatpush1.msra.mxu0 %v156
  %795 = vmatprep.subr.mxu0 %v159
  %796 = vmatpush1.msra.mxu0 %v158
  %797 = vmatprep.subr.mxu0 %v161
  %798 = vmatpush1.msra.mxu0 %v160
  %799 = vmatprep.subr.mxu0 %v163
  %800 = vmatpush1.msra.mxu0 %v162
  %801 = vmatprep.subr.mxu0 %v165
  %802 = vmatpush1.msra.mxu0 %v164
  %803 = vmatprep.subr.mxu0 %v167
  %804 = vmatpush1.msra.mxu0 %v166
  %805 = vmatprep.mubr.f32.mxu0 %v514
  %806 = vmatmul.mubr.f32.gmra.mrb[0].mxu0 %v513
  %v807 = vpop.f32.mrb[0].mxu0
  %v808 = vadd.f32 0.0, %v807
  %v809 = vpop.f32.mrb[0].mxu0
  %v810 = vadd.f32 0.0, %v809
  %811 = vdwg.mxu0
  %v812 = vsub.f32 %v737, %v808
  %v813 = vsub.f32 %v739, %v810
  %v814 = vmul.f32 %v812, 0.00390625
  %v815 = vmul.f32 %v813, 0.00390625
  %816 = vmatprep.subr.mxu0 %v105
  %817 = vmatpush1.msra.mxu0 %v104
  %818 = vmatprep.subr.mxu0 %v107
  %819 = vmatpush1.msra.mxu0 %v106
  %820 = vmatprep.subr.mxu0 %v109
  %821 = vmatpush1.msra.mxu0 %v108
  %822 = vmatprep.subr.mxu0 %v111
  %823 = vmatpush1.msra.mxu0 %v110
  %824 = vmatprep.subr.mxu0 %v113
  %825 = vmatpush1.msra.mxu0 %v112
  %826 = vmatprep.subr.mxu0 %v115
  %827 = vmatpush1.msra.mxu0 %v114
  %828 = vmatprep.subr.mxu0 %v117
  %829 = vmatpush1.msra.mxu0 %v116
  %830 = vmatprep.subr.mxu0 %v119
  %831 = vmatpush1.msra.mxu0 %v118
  %832 = vmatprep.subr.mxu0 %v121
  %833 = vmatpush1.msra.mxu0 %v120
  %834 = vmatprep.subr.mxu0 %v123
  %835 = vmatpush1.msra.mxu0 %v122
  %836 = vmatprep.subr.mxu0 %v125
  %837 = vmatpush1.msra.mxu0 %v124
  %838 = vmatprep.subr.mxu0 %v127
  %839 = vmatpush1.msra.mxu0 %v126
  %840 = vmatprep.subr.mxu0 %v129
  %841 = vmatpush1.msra.mxu0 %v128
  %842 = vmatprep.subr.mxu0 %v131
  %843 = vmatpush1.msra.mxu0 %v130
  %844 = vmatprep.subr.mxu0 %v133
  %845 = vmatpush1.msra.mxu0 %v132
  %846 = vmatprep.subr.mxu0 %v135
  %847 = vmatpush1.msra.mxu0 %v134
  %848 = vmatprep.subr.mxu0 %v137
  %849 = vmatpush1.msra.mxu0 %v136
  %850 = vmatprep.subr.mxu0 %v139
  %851 = vmatpush1.msra.mxu0 %v138
  %852 = vmatprep.subr.mxu0 %v141
  %853 = vmatpush1.msra.mxu0 %v140
  %854 = vmatprep.subr.mxu0 %v143
  %855 = vmatpush1.msra.mxu0 %v142
  %856 = vmatprep.subr.mxu0 %v145
  %857 = vmatpush1.msra.mxu0 %v144
  %858 = vmatprep.subr.mxu0 %v147
  %859 = vmatpush1.msra.mxu0 %v146
  %860 = vmatprep.subr.mxu0 %v149
  %861 = vmatpush1.msra.mxu0 %v148
  %862 = vmatprep.subr.mxu0 %v151
  %863 = vmatpush1.msra.mxu0 %v150
  %864 = vmatprep.subr.mxu0 %v153
  %865 = vmatpush1.msra.mxu0 %v152
  %866 = vmatprep.subr.mxu0 %v155
  %867 = vmatpush1.msra.mxu0 %v154
  %868 = vmatprep.subr.mxu0 %v157
  %869 = vmatpush1.msra.mxu0 %v156
  %870 = vmatprep.subr.mxu0 %v159
  %871 = vmatpush1.msra.mxu0 %v158
  %872 = vmatprep.subr.mxu0 %v161
  %873 = vmatpush1.msra.mxu0 %v160
  %874 = vmatprep.subr.mxu0 %v163
  %875 = vmatpush1.msra.mxu0 %v162
  %876 = vmatprep.subr.mxu0 %v165
  %877 = vmatpush1.msra.mxu0 %v164
  %878 = vmatprep.subr.mxu0 %v167
  %879 = vmatpush1.msra.mxu0 %v166
  %880 = vmatprep.mubr.f32.mxu0 %v473
  %881 = vmatmul.mubr.f32.gmra.mrb[0].mxu0 %v472
  %v882 = vpop.f32.mrb[0].mxu0
  %v883 = vadd.f32 0.0, %v882
  %v884 = vpop.f32.mrb[0].mxu0
  %v885 = vadd.f32 0.0, %v884
  %886 = vdwg.mxu0
  %887 = vmatprep.subr.mxu0 %v41
  %888 = vmatpush1.msra.mxu0 %v40
  %889 = vmatprep.subr.mxu0 %v43
  %890 = vmatpush1.msra.mxu0 %v42
  %891 = vmatprep.subr.mxu0 %v45
  %892 = vmatpush1.msra.mxu0 %v44
  %893 = vmatprep.subr.mxu0 %v47
  %894 = vmatpush1.msra.mxu0 %v46
  %895 = vmatprep.subr.mxu0 %v49
  %896 = vmatpush1.msra.mxu0 %v48
  %897 = vmatprep.subr.mxu0 %v51
  %898 = vmatpush1.msra.mxu0 %v50
  %899 = vmatprep.subr.mxu0 %v53
  %900 = vmatpush1.msra.mxu0 %v52
  %901 = vmatprep.subr.mxu0 %v55
  %902 = vmatpush1.msra.mxu0 %v54
  %903 = vmatprep.subr.mxu0 %v57
  %904 = vmatpush1.msra.mxu0 %v56
  %905 = vmatprep.subr.mxu0 %v59
  %906 = vmatpush1.msra.mxu0 %v58
  %907 = vmatprep.subr.mxu0 %v61
  %908 = vmatpush1.msra.mxu0 %v60
  %909 = vmatprep.subr.mxu0 %v63
  %910 = vmatpush1.msra.mxu0 %v62
  %911 = vmatprep.subr.mxu0 %v65
  %912 = vmatpush1.msra.mxu0 %v64
  %913 = vmatprep.subr.mxu0 %v67
  %914 = vmatpush1.msra.mxu0 %v66
  %915 = vmatprep.subr.mxu0 %v69
  %916 = vmatpush1.msra.mxu0 %v68
  %917 = vmatprep.subr.mxu0 %v71
  %918 = vmatpush1.msra.mxu0 %v70
  %919 = vmatprep.subr.mxu0 %v73
  %920 = vmatpush1.msra.mxu0 %v72
  %921 = vmatprep.subr.mxu0 %v75
  %922 = vmatpush1.msra.mxu0 %v74
  %923 = vmatprep.subr.mxu0 %v77
  %924 = vmatpush1.msra.mxu0 %v76
  %925 = vmatprep.subr.mxu0 %v79
  %926 = vmatpush1.msra.mxu0 %v78
  %927 = vmatprep.subr.mxu0 %v81
  %928 = vmatpush1.msra.mxu0 %v80
  %929 = vmatprep.subr.mxu0 %v83
  %930 = vmatpush1.msra.mxu0 %v82
  %931 = vmatprep.subr.mxu0 %v85
  %932 = vmatpush1.msra.mxu0 %v84
  %933 = vmatprep.subr.mxu0 %v87
  %934 = vmatpush1.msra.mxu0 %v86
  %935 = vmatprep.subr.mxu0 %v89
  %936 = vmatpush1.msra.mxu0 %v88
  %937 = vmatprep.subr.mxu0 %v91
  %938 = vmatpush1.msra.mxu0 %v90
  %939 = vmatprep.subr.mxu0 %v93
  %940 = vmatpush1.msra.mxu0 %v92
  %941 = vmatprep.subr.mxu0 %v95
  %942 = vmatpush1.msra.mxu0 %v94
  %943 = vmatprep.subr.mxu0 %v97
  %944 = vmatpush1.msra.mxu0 %v96
  %945 = vmatprep.subr.mxu0 %v99
  %946 = vmatpush1.msra.mxu0 %v98
  %947 = vmatprep.subr.mxu0 %v101
  %948 = vmatpush1.msra.mxu0 %v100
  %949 = vmatprep.subr.mxu0 %v103
  %950 = vmatpush1.msra.mxu0 %v102
  %951 = vmatprep.mubr.f32.mxu0 %v467
  %952 = vmatmul.mubr.f32.gmra.mrb[0].mxu0 %v466
  %v953 = vpop.f32.mrb[0].mxu0
  %v954 = vadd.f32 %v883, %v953
  %v955 = vpop.f32.mrb[0].mxu0
  %v956 = vadd.f32 %v885, %v955
  %957 = vdwg.mxu0
  %v958 = vmul.f32 %v954, 0.00390625
  %v959 = vmul.f32 %v956, 0.00390625
  %960 = vmatprep.subr.mxu0 %v41
  %961 = vmatpush1.msra.mxu0 %v40
  %962 = vmatprep.subr.mxu0 %v43
  %963 = vmatpush1.msra.mxu0 %v42
  %964 = vmatprep.subr.mxu0 %v45
  %965 = vmatpush1.msra.mxu0 %v44
  %966 = vmatprep.subr.mxu0 %v47
  %967 = vmatpush1.msra.mxu0 %v46
  %968 = vmatprep.subr.mxu0 %v49
  %969 = vmatpush1.msra.mxu0 %v48
  %970 = vmatprep.subr.mxu0 %v51
  %971 = vmatpush1.msra.mxu0 %v50
  %972 = vmatprep.subr.mxu0 %v53
  %973 = vmatpush1.msra.mxu0 %v52
  %974 = vmatprep.subr.mxu0 %v55
  %975 = vmatpush1.msra.mxu0 %v54
  %976 = vmatprep.subr.mxu0 %v57
  %977 = vmatpush1.msra.mxu0 %v56
  %978 = vmatprep.subr.mxu0 %v59
  %979 = vmatpush1.msra.mxu0 %v58
  %980 = vmatprep.subr.mxu0 %v61
  %981 = vmatpush1.msra.mxu0 %v60
  %982 = vmatprep.subr.mxu0 %v63
  %983 = vmatpush1.msra.mxu0 %v62
  %984 = vmatprep.subr.mxu0 %v65
  %985 = vmatpush1.msra.mxu0 %v64
  %986 = vmatprep.subr.mxu0 %v67
  %987 = vmatpush1.msra.mxu0 %v66
  %988 = vmatprep.subr.mxu0 %v69
  %989 = vmatpush1.msra.mxu0 %v68
  %990 = vmatprep.subr.mxu0 %v71
  %991 = vmatpush1.msra.mxu0 %v70
  %992 = vmatprep.subr.mxu0 %v73
  %993 = vmatpush1.msra.mxu0 %v72
  %994 = vmatprep.subr.mxu0 %v75
  %995 = vmatpush1.msra.mxu0 %v74
  %996 = vmatprep.subr.mxu0 %v77
  %997 = vmatpush1.msra.mxu0 %v76
  %998 = vmatprep.subr.mxu0 %v79
  %999 = vmatpush1.msra.mxu0 %v78
  %1000 = vmatprep.subr.mxu0 %v81
  %1001 = vmatpush1.msra.mxu0 %v80
  %1002 = vmatprep.subr.mxu0 %v83
  %1003 = vmatpush1.msra.mxu0 %v82
  %1004 = vmatprep.subr.mxu0 %v85
  %1005 = vmatpush1.msra.mxu0 %v84
  %1006 = vmatprep.subr.mxu0 %v87
  %1007 = vmatpush1.msra.mxu0 %v86
  %1008 = vmatprep.subr.mxu0 %v89
  %1009 = vmatpush1.msra.mxu0 %v88
  %1010 = vmatprep.subr.mxu0 %v91
  %1011 = vmatpush1.msra.mxu0 %v90
  %1012 = vmatprep.subr.mxu0 %v93
  %1013 = vmatpush1.msra.mxu0 %v92
  %1014 = vmatprep.subr.mxu0 %v95
  %1015 = vmatpush1.msra.mxu0 %v94
  %1016 = vmatprep.subr.mxu0 %v97
  %1017 = vmatpush1.msra.mxu0 %v96
  %1018 = vmatprep.subr.mxu0 %v99
  %1019 = vmatpush1.msra.mxu0 %v98
  %1020 = vmatprep.subr.mxu0 %v101
  %1021 = vmatpush1.msra.mxu0 %v100
  %1022 = vmatprep.subr.mxu0 %v103
  %1023 = vmatpush1.msra.mxu0 %v102
  %1024 = vmatprep.mubr.f32.mxu0 %v473
  %1025 = vmatmul.mubr.f32.gmra.mrb[0].mxu0 %v472
  %v1026 = vpop.f32.mrb[0].mxu0
  %v1027 = vadd.f32 0.0, %v1026
  %v1028 = vpop.f32.mrb[0].mxu0
  %v1029 = vadd.f32 0.0, %v1028
  %1030 = vdwg.mxu0
  %1031 = vmatprep.subr.mxu0 %v105
  %1032 = vmatpush1.msra.mxu0 %v104
  %1033 = vmatprep.subr.mxu0 %v107
  %1034 = vmatpush1.msra.mxu0 %v106
  %1035 = vmatprep.subr.mxu0 %v109
  %1036 = vmatpush1.msra.mxu0 %v108
  %1037 = vmatprep.subr.mxu0 %v111
  %1038 = vmatpush1.msra.mxu0 %v110
  %1039 = vmatprep.subr.mxu0 %v113
  %1040 = vmatpush1.msra.mxu0 %v112
  %1041 = vmatprep.subr.mxu0 %v115
  %1042 = vmatpush1.msra.mxu0 %v114
  %1043 = vmatprep.subr.mxu0 %v117
  %1044 = vmatpush1.msra.mxu0 %v116
  %1045 = vmatprep.subr.mxu0 %v119
  %1046 = vmatpush1.msra.mxu0 %v118
  %1047 = vmatprep.subr.mxu0 %v121
  %1048 = vmatpush1.msra.mxu0 %v120
  %1049 = vmatprep.subr.mxu0 %v123
  %1050 = vmatpush1.msra.mxu0 %v122
  %1051 = vmatprep.subr.mxu0 %v125
  %1052 = vmatpush1.msra.mxu0 %v124
  %1053 = vmatprep.subr.mxu0 %v127
  %1054 = vmatpush1.msra.mxu0 %v126
  %1055 = vmatprep.subr.mxu0 %v129
  %1056 = vmatpush1.msra.mxu0 %v128
  %1057 = vmatprep.subr.mxu0 %v131
  %1058 = vmatpush1.msra.mxu0 %v130
  %1059 = vmatprep.subr.mxu0 %v133
  %1060 = vmatpush1.msra.mxu0 %v132
  %1061 = vmatprep.subr.mxu0 %v135
  %1062 = vmatpush1.msra.mxu0 %v134
  %1063 = vmatprep.subr.mxu0 %v137
  %1064 = vmatpush1.msra.mxu0 %v136
  %1065 = vmatprep.subr.mxu0 %v139
  %1066 = vmatpush1.msra.mxu0 %v138
  %1067 = vmatprep.subr.mxu0 %v141
  %1068 = vmatpush1.msra.mxu0 %v140
  %1069 = vmatprep.subr.mxu0 %v143
  %1070 = vmatpush1.msra.mxu0 %v142
  %1071 = vmatprep.subr.mxu0 %v145
  %1072 = vmatpush1.msra.mxu0 %v144
  %1073 = vmatprep.subr.mxu0 %v147
  %1074 = vmatpush1.msra.mxu0 %v146
  %1075 = vmatprep.subr.mxu0 %v149
  %1076 = vmatpush1.msra.mxu0 %v148
  %1077 = vmatprep.subr.mxu0 %v151
  %1078 = vmatpush1.msra.mxu0 %v150
  %1079 = vmatprep.subr.mxu0 %v153
  %1080 = vmatpush1.msra.mxu0 %v152
  %1081 = vmatprep.subr.mxu0 %v155
  %1082 = vmatpush1.msra.mxu0 %v154
  %1083 = vmatprep.subr.mxu0 %v157
  %1084 = vmatpush1.msra.mxu0 %v156
  %1085 = vmatprep.subr.mxu0 %v159
  %1086 = vmatpush1.msra.mxu0 %v158
  %1087 = vmatprep.subr.mxu0 %v161
  %1088 = vmatpush1.msra.mxu0 %v160
  %1089 = vmatprep.subr.mxu0 %v163
  %1090 = vmatpush1.msra.mxu0 %v162
  %1091 = vmatprep.subr.mxu0 %v165
  %1092 = vmatpush1.msra.mxu0 %v164
  %1093 = vmatprep.subr.mxu0 %v167
  %1094 = vmatpush1.msra.mxu0 %v166
  %1095 = vmatprep.mubr.f32.mxu0 %v467
  %1096 = vmatmul.mubr.f32.gmra.mrb[0].mxu0 %v466
  %v1097 = vpop.f32.mrb[0].mxu0
  %v1098 = vadd.f32 0.0, %v1097
  %v1099 = vpop.f32.mrb[0].mxu0
  %v1100 = vadd.f32 0.0, %v1099
  %1101 = vdwg.mxu0
  %v1102 = vsub.f32 %v1027, %v1098
  %v1103 = vsub.f32 %v1029, %v1100
  %v1104 = vmul.f32 %v1102, 0.00390625
  %v1105 = vmul.f32 %v1103, 0.00390625
  %v1106 = vmax.f32 %v668, 0.0
  %v1107 = vmax.f32 %v669, 0.0
  %v1108 = vmax.f32 %v814, 0.0
  %v1109 = vmax.f32 %v815, 0.0
  %v1110 = vld [vmem:[%s10] sm:$0xff]
  %vm1111 = vcmask 64512
  %v1113 = vsel %vm1111, %v1110, 0
  %1115 = vmatprep.subr.mxu0 %v1107
  %1116 = vmatpush1.msra.mxu0 %v1106
  %1117 = vmatprep.subr.mxu0 0.0
  %1118 = vmatpush1.msra.mxu0 0.0
  %1119 = vmatprep.subr.mxu0 0.0
  %1120 = vmatpush1.msra.mxu0 0.0
  %1121 = vmatprep.subr.mxu0 0.0
  %1122 = vmatpush1.msra.mxu0 0.0
  %1123 = vmatprep.subr.mxu0 0.0
  %1124 = vmatpush1.msra.mxu0 0.0
  %1125 = vmatprep.subr.mxu0 0.0
  %1126 = vmatpush1.msra.mxu0 0.0
  %1127 = vmatprep.subr.mxu0 0.0
  %1128 = vmatpush1.msra.mxu0 0.0
  %1129 = vmatprep.subr.mxu0 0.0
  %1130 = vmatpush1.msra.mxu0 0.0
  %1131 = vmatprep.subr.mxu0 0.0
  %1132 = vmatpush1.msra.mxu0 0.0
  %1133 = vmatprep.subr.mxu0 0.0
  %1134 = vmatpush1.msra.mxu0 0.0
  %1135 = vmatprep.subr.mxu0 0.0
  %1136 = vmatpush1.msra.mxu0 0.0
  %1137 = vmatprep.subr.mxu0 0.0
  %1138 = vmatpush1.msra.mxu0 0.0
  %1139 = vmatprep.subr.mxu0 0.0
  %1140 = vmatpush1.msra.mxu0 0.0
  %1141 = vmatprep.subr.mxu0 0.0
  %1142 = vmatpush1.msra.mxu0 0.0
  %1143 = vmatprep.subr.mxu0 0.0
  %1144 = vmatpush1.msra.mxu0 0.0
  %1145 = vmatprep.subr.mxu0 0.0
  %1146 = vmatpush1.msra.mxu0 0.0
  %1147 = vmatprep.subr.mxu0 0.0
  %1148 = vmatpush1.msra.mxu0 0.0
  %1149 = vmatprep.subr.mxu0 0.0
  %1150 = vmatpush1.msra.mxu0 0.0
  %1151 = vmatprep.subr.mxu0 0.0
  %1152 = vmatpush1.msra.mxu0 0.0
  %1153 = vmatprep.subr.mxu0 0.0
  %1154 = vmatpush1.msra.mxu0 0.0
  %1155 = vmatprep.subr.mxu0 0.0
  %1156 = vmatpush1.msra.mxu0 0.0
  %1157 = vmatprep.subr.mxu0 0.0
  %1158 = vmatpush1.msra.mxu0 0.0
  %1159 = vmatprep.subr.mxu0 0.0
  %1160 = vmatpush1.msra.mxu0 0.0
  %1161 = vmatprep.subr.mxu0 0.0
  %1162 = vmatpush1.msra.mxu0 0.0
  %1163 = vmatprep.subr.mxu0 0.0
  %1164 = vmatpush1.msra.mxu0 0.0
  %1165 = vmatprep.subr.mxu0 0.0
  %1166 = vmatpush1.msra.mxu0 0.0
  %1167 = vmatprep.subr.mxu0 0.0
  %1168 = vmatpush1.msra.mxu0 0.0
  %1169 = vmatprep.subr.mxu0 0.0
  %1170 = vmatpush1.msra.mxu0 0.0
  %1171 = vmatprep.subr.mxu0 0.0
  %1172 = vmatpush1.msra.mxu0 0.0
  %1173 = vmatprep.subr.mxu0 0.0
  %1174 = vmatpush1.msra.mxu0 0.0
  %1175 = vmatprep.subr.mxu0 0.0
  %1176 = vmatpush1.msra.mxu0 0.0
  %1177 = vmatprep.subr.mxu0 0.0
  %1178 = vmatpush1.msra.mxu0 0.0
  %1179 = vmatprep.mubr.f32.mxu0 0.0
  %1180 = vmatmul.mubr.f32.gmra.mrb[0].mxu0 %v1113
  %v1181 = vpop.f32.mrb[0].mxu0
  %v1182 = vadd.f32 0.0, %v1181
  %v1183 = vpop.f32.mrb[0].mxu0
  %v1184 = vadd.f32 0.0, %v1183
  %1185 = vdwg.mxu0
  %v1186 = vadd.f32 %v1182, %v1184
  %1187 = vadd.xlane.f32.xlu0 %v1186
  %v1188 = vpop.xlane.xlu0 %1187
  %v1189 = vmul.f32 %v1188, 0.001953125
  %v1190 = vsub.f32 %v1106, %v1189
  %v1191 = vsub.f32 %v1107, %v1189
  %v1192 = vmul.f32 %v1190, %v1190
  %v1193 = vmul.f32 %v1191, %v1191
  %1194 = vmatprep.subr.mxu0 %v1193
  %1195 = vmatpush1.msra.mxu0 %v1192
  %1196 = vmatprep.subr.mxu0 0.0
  %1197 = vmatpush1.msra.mxu0 0.0
  %1198 = vmatprep.subr.mxu0 0.0
  %1199 = vmatpush1.msra.mxu0 0.0
  %1200 = vmatprep.subr.mxu0 0.0
  %1201 = vmatpush1.msra.mxu0 0.0
  %1202 = vmatprep.subr.mxu0 0.0
  %1203 = vmatpush1.msra.mxu0 0.0
  %1204 = vmatprep.subr.mxu0 0.0
  %1205 = vmatpush1.msra.mxu0 0.0
  %1206 = vmatprep.subr.mxu0 0.0
  %1207 = vmatpush1.msra.mxu0 0.0
  %1208 = vmatprep.subr.mxu0 0.0
  %1209 = vmatpush1.msra.mxu0 0.0
  %1210 = vmatprep.subr.mxu0 0.0
  %1211 = vmatpush1.msra.mxu0 0.0
  %1212 = vmatprep.subr.mxu0 0.0
  %1213 = vmatpush1.msra.mxu0 0.0
  %1214 = vmatprep.subr.mxu0 0.0
  %1215 = vmatpush1.msra.mxu0 0.0
  %1216 = vmatprep.subr.mxu0 0.0
  %1217 = vmatpush1.msra.mxu0 0.0
  %1218 = vmatprep.subr.mxu0 0.0
  %1219 = vmatpush1.msra.mxu0 0.0
  %1220 = vmatprep.subr.mxu0 0.0
  %1221 = vmatpush1.msra.mxu0 0.0
  %1222 = vmatprep.subr.mxu0 0.0
  %1223 = vmatpush1.msra.mxu0 0.0
  %1224 = vmatprep.subr.mxu0 0.0
  %1225 = vmatpush1.msra.mxu0 0.0
  %1226 = vmatprep.subr.mxu0 0.0
  %1227 = vmatpush1.msra.mxu0 0.0
  %1228 = vmatprep.subr.mxu0 0.0
  %1229 = vmatpush1.msra.mxu0 0.0
  %1230 = vmatprep.subr.mxu0 0.0
  %1231 = vmatpush1.msra.mxu0 0.0
  %1232 = vmatprep.subr.mxu0 0.0
  %1233 = vmatpush1.msra.mxu0 0.0
  %1234 = vmatprep.subr.mxu0 0.0
  %1235 = vmatpush1.msra.mxu0 0.0
  %1236 = vmatprep.subr.mxu0 0.0
  %1237 = vmatpush1.msra.mxu0 0.0
  %1238 = vmatprep.subr.mxu0 0.0
  %1239 = vmatpush1.msra.mxu0 0.0
  %1240 = vmatprep.subr.mxu0 0.0
  %1241 = vmatpush1.msra.mxu0 0.0
  %1242 = vmatprep.subr.mxu0 0.0
  %1243 = vmatpush1.msra.mxu0 0.0
  %1244 = vmatprep.subr.mxu0 0.0
  %1245 = vmatpush1.msra.mxu0 0.0
  %1246 = vmatprep.subr.mxu0 0.0
  %1247 = vmatpush1.msra.mxu0 0.0
  %1248 = vmatprep.subr.mxu0 0.0
  %1249 = vmatpush1.msra.mxu0 0.0
  %1250 = vmatprep.subr.mxu0 0.0
  %1251 = vmatpush1.msra.mxu0 0.0
  %1252 = vmatprep.subr.mxu0 0.0
  %1253 = vmatpush1.msra.mxu0 0.0
  %1254 = vmatprep.subr.mxu0 0.0
  %1255 = vmatpush1.msra.mxu0 0.0
  %1256 = vmatprep.subr.mxu0 0.0
  %1257 = vmatpush1.msra.mxu0 0.0
  %1258 = vmatprep.mubr.f32.mxu0 0.0
  %1259 = vmatmul.mubr.f32.gmra.mrb[0].mxu0 %v1113
  %v1260 = vpop.f32.mrb[0].mxu0
  %v1261 = vadd.f32 0.0, %v1260
  %v1262 = vpop.f32.mrb[0].mxu0
  %v1263 = vadd.f32 0.0, %v1262
  %1264 = vdwg.mxu0
  %v1265 = vadd.f32 %v1261, %v1263
  %1266 = vadd.xlane.f32.xlu0 %v1265
  %v1267 = vpop.xlane.xlu0 %1266
  %v1268 = vmul.f32 %v1267, 0.001953125
  %v1269 = vadd.f32 %v1268, 1e-05
  %v1270 = vrsqrt.pop %v1269
  %v1271 = vmul.f32 %v1190, %v1270
  %v1272 = vmul.f32 %v1191, %v1270
  %v1273 = vadd.f32 %v1271, %v958
  %v1274 = vadd.f32 %v1272, %v959
  %1275 = vst [vmem:[%s11] sm:$0xff] %v1273
  %1276 = vst [vmem:[%s11 + $0x8] sm:$0xff] %v1274
  %1277 = vmatprep.subr.mxu0 %v1109
  %1278 = vmatpush1.msra.mxu0 %v1108
  %1279 = vmatprep.subr.mxu0 0.0
  %1280 = vmatpush1.msra.mxu0 0.0
  %1281 = vmatprep.subr.mxu0 0.0
  %1282 = vmatpush1.msra.mxu0 0.0
  %1283 = vmatprep.subr.mxu0 0.0
  %1284 = vmatpush1.msra.mxu0 0.0
  %1285 = vmatprep.subr.mxu0 0.0
  %1286 = vmatpush1.msra.mxu0 0.0
  %1287 = vmatprep.subr.mxu0 0.0
  %1288 = vmatpush1.msra.mxu0 0.0
  %1289 = vmatprep.subr.mxu0 0.0
  %1290 = vmatpush1.msra.mxu0 0.0
  %1291 = vmatprep.subr.mxu0 0.0
  %1292 = vmatpush1.msra.mxu0 0.0
  %1293 = vmatprep.subr.mxu0 0.0
  %1294 = vmatpush1.msra.mxu0 0.0
  %1295 = vmatprep.subr.mxu0 0.0
  %1296 = vmatpush1.msra.mxu0 0.0
  %1297 = vmatprep.subr.mxu0 0.0
  %1298 = vmatpush1.msra.mxu0 0.0
  %1299 = vmatprep.subr.mxu0 0.0
  %1300 = vmatpush1.msra.mxu0 0.0
  %1301 = vmatprep.subr.mxu0 0.0
  %1302 = vmatpush1.msra.mxu0 0.0
  %1303 = vmatprep.subr.mxu0 0.0
  %1304 = vmatpush1.msra.mxu0 0.0
  %1305 = vmatprep.subr.mxu0 0.0
  %1306 = vmatpush1.msra.mxu0 0.0
  %1307 = vmatprep.subr.mxu0 0.0
  %1308 = vmatpush1.msra.mxu0 0.0
  %1309 = vmatprep.subr.mxu0 0.0
  %1310 = vmatpush1.msra.mxu0 0.0
  %1311 = vmatprep.subr.mxu0 0.0
  %1312 = vmatpush1.msra.mxu0 0.0
  %1313 = vmatprep.subr.mxu0 0.0
  %1314 = vmatpush1.msra.mxu0 0.0
  %1315 = vmatprep.subr.mxu0 0.0
  %1316 = vmatpush1.msra.mxu0 0.0
  %1317 = vmatprep.subr.mxu0 0.0
  %1318 = vmatpush1.msra.mxu0 0.0
  %1319 = vmatprep.subr.mxu0 0.0
  %1320 = vmatpush1.msra.mxu0 0.0
  %1321 = vmatprep.subr.mxu0 0.0
  %1322 = vmatpush1.msra.mxu0 0.0
  %1323 = vmatprep.subr.mxu0 0.0
  %1324 = vmatpush1.msra.mxu0 0.0
  %1325 = vmatprep.subr.mxu0 0.0
  %1326 = vmatpush1.msra.mxu0 0.0
  %1327 = vmatprep.subr.mxu0 0.0
  %1328 = vmatpush1.msra.mxu0 0.0
  %1329 = vmatprep.subr.mxu0 0.0
  %1330 = vmatpush1.msra.mxu0 0.0
  %1331 = vmatprep.subr.mxu0 0.0
  %1332 = vmatpush1.msra.mxu0 0.0
  %1333 = vmatprep.subr.mxu0 0.0
  %1334 = vmatpush1.msra.mxu0 0.0
  %1335 = vmatprep.subr.mxu0 0.0
  %1336 = vmatpush1.msra.mxu0 0.0
  %1337 = vmatprep.subr.mxu0 0.0
  %1338 = vmatpush1.msra.mxu0 0.0
  %1339 = vmatprep.subr.mxu0 0.0
  %1340 = vmatpush1.msra.mxu0 0.0
  %1341 = vmatprep.mubr.f32.mxu0 0.0
  %1342 = vmatmul.mubr.f32.gmra.mrb[0].mxu0 %v1113
  %v1343 = vpop.f32.mrb[0].mxu0
  %v1344 = vadd.f32 0.0, %v1343
  %v1345 = vpop.f32.mrb[0].mxu0
  %v1346 = vadd.f32 0.0, %v1345
  %1347 = vdwg.mxu0
  %v1348 = vadd.f32 %v1344, %v1346
  %1349 = vadd.xlane.f32.xlu0 %v1348
  %v1350 = vpop.xlane.xlu0 %1349
  %v1351 = vmul.f32 %v1350, 0.001953125
  %v1352 = vsub.f32 %v1108, %v1351
  %v1353 = vsub.f32 %v1109, %v1351
  %v1354 = vmul.f32 %v1352, %v1352
  %v1355 = vmul.f32 %v1353, %v1353
  %1356 = vmatprep.subr.mxu0 %v1355
  %1357 = vmatpush1.msra.mxu0 %v1354
  %1358 = vmatprep.subr.mxu0 0.0
  %1359 = vmatpush1.msra.mxu0 0.0
  %1360 = vmatprep.subr.mxu0 0.0
  %1361 = vmatpush1.msra.mxu0 0.0
  %1362 = vmatprep.subr.mxu0 0.0
  %1363 = vmatpush1.msra.mxu0 0.0
  %1364 = vmatprep.subr.mxu0 0.0
  %1365 = vmatpush1.msra.mxu0 0.0
  %1366 = vmatprep.subr.mxu0 0.0
  %1367 = vmatpush1.msra.mxu0 0.0
  %1368 = vmatprep.subr.mxu0 0.0
  %1369 = vmatpush1.msra.mxu0 0.0
  %1370 = vmatprep.subr.mxu0 0.0
  %1371 = vmatpush1.msra.mxu0 0.0
  %1372 = vmatprep.subr.mxu0 0.0
  %1373 = vmatpush1.msra.mxu0 0.0
  %1374 = vmatprep.subr.mxu0 0.0
  %1375 = vmatpush1.msra.mxu0 0.0
  %1376 = vmatprep.subr.mxu0 0.0
  %1377 = vmatpush1.msra.mxu0 0.0
  %1378 = vmatprep.subr.mxu0 0.0
  %1379 = vmatpush1.msra.mxu0 0.0
  %1380 = vmatprep.subr.mxu0 0.0
  %1381 = vmatpush1.msra.mxu0 0.0
  %1382 = vmatprep.subr.mxu0 0.0
  %1383 = vmatpush1.msra.mxu0 0.0
  %1384 = vmatprep.subr.mxu0 0.0
  %1385 = vmatpush1.msra.mxu0 0.0
  %1386 = vmatprep.subr.mxu0 0.0
  %1387 = vmatpush1.msra.mxu0 0.0
  %1388 = vmatprep.subr.mxu0 0.0
  %1389 = vmatpush1.msra.mxu0 0.0
  %1390 = vmatprep.subr.mxu0 0.0
  %1391 = vmatpush1.msra.mxu0 0.0
  %1392 = vmatprep.subr.mxu0 0.0
  %1393 = vmatpush1.msra.mxu0 0.0
  %1394 = vmatprep.subr.mxu0 0.0
  %1395 = vmatpush1.msra.mxu0 0.0
  %1396 = vmatprep.subr.mxu0 0.0
  %1397 = vmatpush1.msra.mxu0 0.0
  %1398 = vmatprep.subr.mxu0 0.0
  %1399 = vmatpush1.msra.mxu0 0.0
  %1400 = vmatprep.subr.mxu0 0.0
  %1401 = vmatpush1.msra.mxu0 0.0
  %1402 = vmatprep.subr.mxu0 0.0
  %1403 = vmatpush1.msra.mxu0 0.0
  %1404 = vmatprep.subr.mxu0 0.0
  %1405 = vmatpush1.msra.mxu0 0.0
  %1406 = vmatprep.subr.mxu0 0.0
  %1407 = vmatpush1.msra.mxu0 0.0
  %1408 = vmatprep.subr.mxu0 0.0
  %1409 = vmatpush1.msra.mxu0 0.0
  %1410 = vmatprep.subr.mxu0 0.0
  %1411 = vmatpush1.msra.mxu0 0.0
  %1412 = vmatprep.subr.mxu0 0.0
  %1413 = vmatpush1.msra.mxu0 0.0
  %1414 = vmatprep.subr.mxu0 0.0
  %1415 = vmatpush1.msra.mxu0 0.0
  %1416 = vmatprep.subr.mxu0 0.0
  %1417 = vmatpush1.msra.mxu0 0.0
  %1418 = vmatprep.subr.mxu0 0.0
  %1419 = vmatpush1.msra.mxu0 0.0
  %1420 = vmatprep.mubr.f32.mxu0 0.0
  %1421 = vmatmul.mubr.f32.gmra.mrb[0].mxu0 %v1113
  %v1422 = vpop.f32.mrb[0].mxu0
  %v1423 = vadd.f32 0.0, %v1422
  %v1424 = vpop.f32.mrb[0].mxu0
  %v1425 = vadd.f32 0.0, %v1424
  %1426 = vdwg.mxu0
  %v1427 = vadd.f32 %v1423, %v1425
  %1428 = vadd.xlane.f32.xlu0 %v1427
  %v1429 = vpop.xlane.xlu0 %1428
  %v1430 = vmul.f32 %v1429, 0.001953125
  %v1431 = vadd.f32 %v1430, 1e-05
  %v1432 = vrsqrt.pop %v1431
  %v1433 = vmul.f32 %v1352, %v1432
  %v1434 = vmul.f32 %v1353, %v1432
  %v1435 = vadd.f32 %v1433, %v1104
  %v1436 = vadd.f32 %v1434, %v1105
  %1437 = vst [vmem:[%s12] sm:$0xff] %v1435
  %1438 = vst [vmem:[%s12 + $0x8] sm:$0xff] %v1436
  // Predicated region
  $region46: #{_ufb_forward.1} parent=0 // pred_check
    _
  $region47: #{_ufb_forward.1} parent=0 // pred_check_branch
    %1440 = sbr.rel (0) target = $region49
  $region48: #{_ufb_forward.1} parent=0 // pred_region
    _
  $region49: #{_ufb_forward.1} parent=0 // pred_fallthru
    _
  // Predicated region
  $region50: #{_ufb_forward.1} parent=0 // pred_check
    _
  $region51: #{_ufb_forward.1} parent=0 // pred_check_branch
    %1442 = sbr.rel (0) target = $region53
  $region52: #{_ufb_forward.1} parent=0 // pred_region
    _
  $region53: #{_ufb_forward.1} parent=0 // pred_fallthru
    _
  // Predicated region
  $region54: #{_ufb_forward.1} parent=0 // pred_check
    _
  $region55: #{_ufb_forward.1} parent=0 // pred_check_branch
    %1444 = sbr.rel (0) target = $region57
  $region56: #{_ufb_forward.1} parent=0 // pred_region
    _
  $region57: #{_ufb_forward.1} parent=0 // pred_fallthru
    _
  // Predicated region
  $region58: #{_ufb_forward.1} parent=0 // pred_check
    _
  $region59: #{_ufb_forward.1} parent=0 // pred_check_branch
    %1446 = sbr.rel (0) target = $region61
  $region60: #{_ufb_forward.1} parent=0 // pred_region
    _
  $region61: #{_ufb_forward.1} parent=0 // pred_fallthru
    _

</llo_original>
